<compile_context>
chip_gen: v6e
topology: v6e:2x2x1
jax: 0.10.0
libtpu: 0.0.40
codegen_flags: <defaults>
</compile_context>

<pallas_src>
import functools

import jax
import jax.numpy as jnp
from jax import lax
from jax.experimental import pallas as pl
from jax.experimental.pallas import tpu as pltpu


# ----------------------------- fused Pallas kernel -------------------------- #

def _make_block_kernel(n_layers, cin, cout, H, W, compute_dtype):
    """Build the fused conv-block kernel for a fixed configuration."""
    HW = H * W
    Ho, Wo = H // 2, W // 2
    cmax = max(cin, cout)
    data_off = W + 1              # start of valid data inside the padded flat buffer
    # padded flat activation layout per channel:  [W+1 zeros | H*W data | W+1 zeros]
    # => the tap (dy, dx) view of the image is the contiguous slice starting at dy*W+dx.

    def kernel(*refs):
        x_ref = refs[0]                             # (1, cin, HW)
        wb_refs = refs[1:1 + 2 * n_layers]          # per layer: (cout, 9*cmax), (cout, 1)
        o_ref = refs[1 + 2 * n_layers]              # (1, cout, Ho*Wo)
        act_ref = refs[2 + 2 * n_layers]            # scratch: (cmax, HW + 2W + 2) f32
        xcol_ref = refs[3 + 2 * n_layers]           # scratch: (9*cmax, HW) f32

        # Masks for the dx==0 / dx==2 taps: in the flat layout those slices "wrap"
        # across image rows at the left/right borders; zero them (they stand in for
        # the conv's zero padding columns).  Hoisted out of the layer loop.
        col = lax.broadcasted_iota(jnp.int32, (1, HW), 1) % W
        not_left = col != 0
        not_right = col != (W - 1)

        # One-hot column-compaction matrix for the pooling epilogue: picks every
        # other column of a W-wide row (hm_row @ pool_sel -> Wo pooled values).
        rows_i = lax.broadcasted_iota(jnp.int32, (W, Wo), 0)
        cols_i = lax.broadcasted_iota(jnp.int32, (W, Wo), 1)
        pool_sel = (rows_i == 2 * cols_i).astype(jnp.float32)

        # Load this batch element once; the zero halo comes from zeroing the buffer.
        act_ref[...] = jnp.zeros_like(act_ref)
        act_ref[0:cin, pl.ds(data_off, HW)] = x_ref[0]

        # ---- conv layers: activations stay resident in VMEM across layers ----
        for l in range(n_layers):
            w_ref = wb_refs[2 * l]          # (cout, 9*cmax), zero-padded unused channels
            b_ref = wb_refs[2 * l + 1]      # (cout, 1) f32

            # Gather the 9 shifted taps (static offset slices of the padded buffer)
            # into one im2col matrix -> single K = 9*cmax contraction on the MXU.
            for dy in range(3):
                for dx in range(3):
                    k = dy * 3 + dx
                    slab = act_ref[:, pl.ds(dy * W + dx, HW)]      # (cmax, HW)
                    if dx == 0:
                        slab = jnp.where(not_left, slab, 0.0)
                    elif dx == 2:
                        slab = jnp.where(not_right, slab, 0.0)
                    xcol_ref[k * cmax:(k + 1) * cmax, :] = slab

            # (cout, 9*cmax) @ (9*cmax, HW): lane-dense output (HW on the lane axis).
            acc = jnp.dot(w_ref[...].astype(compute_dtype),
                          xcol_ref[...].astype(compute_dtype),
                          preferred_element_type=jnp.float32)
            acc = jnp.maximum(acc + b_ref[...], 0.0)               # bias + ReLU in f32

            # Write back into the padded buffer for the next layer / the pooling.
            act_ref[0:cout, pl.ds(data_off, HW)] = acc
            if cout < cmax:  # keep unused channel rows zero (general-case safety)
                act_ref[cout:cmax, pl.ds(data_off, HW)] = jnp.zeros(
                    (cmax - cout, HW), jnp.float32)

        # ---- fused MaxPool2d(2, 2) epilogue (no HBM round trip of pre-pool map) ----
        # 2x2 window max at every position via 4 shifted contiguous slices.
        s00 = act_ref[0:cout, pl.ds(data_off, HW)]
        s01 = act_ref[0:cout, pl.ds(data_off + 1, HW)]
        s10 = act_ref[0:cout, pl.ds(data_off + W, HW)]
        s11 = act_ref[0:cout, pl.ds(data_off + W + 1, HW)]
        hv = jnp.maximum(jnp.maximum(s00, s01), jnp.maximum(s10, s11))
        # Compact even rows / even cols and store a lane-dense (cout, Ho*Wo) block.
        # TODO(synk): replace the per-row one-hot matmul compaction with
        # `pl.ds(..., stride=2)` strided loads once lane-strided loads are relied on;
        # the matmul form is used here for lowering robustness.
        for ho in range(Ho):
            hm_row = hv[:, 2 * ho * W: 2 * ho * W + W]             # (cout, W)
            o_ref[0, :, ho * Wo:(ho + 1) * Wo] = jnp.dot(
                hm_row, pool_sel,
                preferred_element_type=jnp.float32).astype(o_ref.dtype)

    return kernel


# --------------------------------- wrapper ---------------------------------- #

def _flatten_conv_weight(w, cmax, compute_dtype):
    """(Cout, Cin_l, 3, 3) -> (Cout, 9*cmax), tap-major / channel-minor, zero padded."""
    cout, cin_l = w.shape[0], w.shape[1]
    wt = jnp.transpose(w, (0, 2, 3, 1))                            # (Cout, ky, kx, Cin_l)
    wt = jnp.pad(wt, ((0, 0), (0, 0), (0, 0), (0, cmax - cin_l)))
    return wt.reshape(cout, 9 * cmax).astype(compute_dtype)


def conv_block_base(x_nchw, params, *, compute_dtype=jnp.float32):
    """Forward pass of ConvBlockBase.  Input/output layout: NCHW (like PyTorch)."""
    N, Cin, H, W = x_nchw.shape
    n_layers = len(params)
    Cout = params[0][0].shape[0]
    assert H % 2 == 0 and W % 2 == 0, "MaxPool2d(2,2) path assumes even H, W"
    HW = H * W
    Ho, Wo = H // 2, W // 2
    cmax = max(Cin, Cout)

    # NCHW already has spatial dims minor: just flatten them (lane-dense, no 9x
    # im2col copy, no NHWC transpose, no padded copy in HBM).
    x_flat = x_nchw.reshape(N, Cin, HW).astype(jnp.float32)

    flat_args = []
    in_specs = [pl.BlockSpec((1, Cin, HW), lambda n: (n, 0, 0))]
    for (w, b) in params:
        flat_args.append(_flatten_conv_weight(w, cmax, compute_dtype))
        flat_args.append(b.reshape(Cout, 1).astype(jnp.float32))
        in_specs.append(pl.BlockSpec((Cout, 9 * cmax), lambda n: (0, 0)))
        in_specs.append(pl.BlockSpec((Cout, 1), lambda n: (0, 0)))

    kernel = _make_block_kernel(n_layers, Cin, Cout, H, W, compute_dtype)

    out = pl.pallas_call(
        kernel,
        out_shape=jax.ShapeDtypeStruct((N, Cout, Ho * Wo), jnp.float32),
        grid_spec=pltpu.PrefetchScalarGridSpec(
            num_scalar_prefetch=0,
            grid=(N,),                                   # one image per grid step
            in_specs=in_specs,
            out_specs=pl.BlockSpec((1, Cout, Ho * Wo), lambda n: (n, 0, 0)),
            scratch_shapes=[
                pltpu.VMEM((cmax, HW + 2 * W + 2), jnp.float32),   # padded activations
                pltpu.VMEM((9 * cmax, HW), jnp.float32),           # im2col matrix
            ],
        ),
        compiler_params=pltpu.CompilerParams(
            dimension_semantics=("parallel",)),
    )(x_flat, *flat_args)
    # TODO(synk): for large images add a spatial-tile grid axis (with halo rows) and a
    # per-generation vmem_limit_bytes budget (64 MiB VMEM on v7x vs 128 MiB on v5e/v6e);
    # at 16x16 the whole image comfortably fits per grid step.
    return out.reshape(N, Cout, Ho, Wo)


# ----------------------- deterministic parameter init ----------------------- #

def init_params(key, in_channels, out_channels, n_layers):
    """Kaiming-uniform-like init matching nn.Conv2d parameter shapes."""
    params = []
    c_in = in_channels
    for _ in range(n_layers):
        key, kw, kb = jax.random.split(key, 3)
        fan_in = c_in * 3 * 3
        bound = 1.0 / (fan_in ** 0.5)
        w = jax.random.uniform(kw, (out_channels, c_in, 3, 3),
                               jnp.float32, -bound, bound)
        b = jax.random.uniform(kb, (out_channels,), jnp.float32, -bound, bound)
        params.append((w, b))
        c_in = out_channels
    return params


# ---------------------------- pure-JAX reference ----------------------------- #

def ref_forward(x_nchw, params):
    x = x_nchw
    for (w, b) in params:
        x = jax.lax.conv_general_dilated(
            x, w, window_strides=(1, 1), padding=((1, 1), (1, 1)),
            dimension_numbers=("NCHW", "OIHW", "NCHW"))
        x = jnp.maximum(x + b[None, :, None, None], 0.0)
    x = jax.lax.reduce_window(x, -jnp.inf, jax.lax.max,
                              (1, 1, 2, 2), (1, 1, 2, 2), "VALID")
    return x


# ----------------------------------- main ------------------------------------ #

if __name__ == "__main__":
    # Small VGG-like block: in_channels=4, out_channels=8, n_layers=2.
    N, Cin, H, W = 2, 4, 16, 16
    Cout, n_layers = 8, 2

    key = jax.random.PRNGKey(0)
    key, kx = jax.random.split(key)
    x = jax.random.normal(kx, (N, Cin, H, W), jnp.float32)     # NCHW like PyTorch
    params = init_params(key, Cin, Cout, n_layers)

    ref = jax.block_until_ready(ref_forward(x, params))

    # f32 path (exact PyTorch semantics).
    fwd_f32 = jax.jit(functools.partial(conv_block_base, compute_dtype=jnp.float32))
    out_f32 = jax.block_until_ready(fwd_f32(x, params))
    assert out_f32.shape == (N, Cout, H // 2, W // 2), out_f32.shape
    assert jnp.allclose(out_f32, ref, rtol=1e-5, atol=1e-5), (
        float(jnp.max(jnp.abs(out_f32 - ref))))

    # bf16-MXU path (v6e/v7x): bf16 operands, f32 accumulation / bias / ReLU.
    fwd_bf16 = jax.jit(functools.partial(conv_block_base, compute_dtype=jnp.bfloat16))
    out_bf16 = jax.block_until_ready(fwd_bf16(x, params))
    assert jnp.allclose(out_bf16, ref, rtol=3e-2, atol=3e-2), (
        float(jnp.max(jnp.abs(out_bf16 - ref))))

    print("KERNEL_OK")
</pallas_src>

<mosaic_0001>
module attributes {stable_mosaic.version = 11 : i64} {
  func.func @kernel(%arg0: i32, %arg1: memref<1x4x256xf32, #tpu.memory_space<vmem>>, %arg2: memref<8x72xf32, #tpu.memory_space<vmem>>, %arg3: memref<8x1xf32, #tpu.memory_space<vmem>>, %arg4: memref<8x72xf32, #tpu.memory_space<vmem>>, %arg5: memref<8x1xf32, #tpu.memory_space<vmem>>, %arg6: memref<1x8x64xf32, #tpu.memory_space<vmem>>, %arg7: memref<8x290xf32, #tpu.memory_space<vmem>>, %arg8: memref<72x256xf32, #tpu.memory_space<vmem>>) attributes {dimension_semantics = [#tpu.dimension_semantics<parallel>], iteration_bounds = array<i64: 2>, scalar_prefetch = 0 : i64, scratch_operands = 2 : i64, tpu.core_type = #tpu.core_type<tc>, window_params = [{transform_indices = @transform_0, window_bounds = array<i64: 1, 4, 256>}, {pipeline_mode = #tpu.pipeline_mode<synchronous>, transform_indices = @transform_1, window_bounds = array<i64: 8, 72>}, {pipeline_mode = #tpu.pipeline_mode<synchronous>, transform_indices = @transform_2, window_bounds = array<i64: 8, 1>}, {pipeline_mode = #tpu.pipeline_mode<synchronous>, transform_indices = @transform_3, window_bounds = array<i64: 8, 72>}, {pipeline_mode = #tpu.pipeline_mode<synchronous>, transform_indices = @transform_4, window_bounds = array<i64: 8, 1>}, {transform_indices = @transform_5, window_bounds = array<i64: 1, 8, 64>}]} {
    %0 = tpu.iota {dimensions = array<i32: 1>} : vector<1x256xi32>
    %c16_i32 = arith.constant 16 : i32
    %c0_i32 = arith.constant 0 : i32
    %1 = arith.cmpi eq, %c16_i32, %c0_i32 : i32
    %c1_i32 = arith.constant 1 : i32
    %2 = arith.select %1, %c1_i32, %c16_i32 : i32
    %3 = vector.broadcast %2 : i32 to vector<1x256xi32>
    %4 = arith.remsi %0, %3 : vector<1x256xi32>
    %c0_i32_0 = arith.constant 0 : i32
    %5 = vector.broadcast %c0_i32_0 : i32 to vector<1x256xi32>
    %6 = arith.cmpi ne, %4, %5 : vector<1x256xi32>
    %c0_i32_1 = arith.constant 0 : i32
    %7 = vector.broadcast %c0_i32_1 : i32 to vector<1x256xi32>
    %8 = arith.cmpi slt, %4, %7 : vector<1x256xi32>
    %c0_i32_2 = arith.constant 0 : i32
    %9 = arith.cmpi slt, %2, %c0_i32_2 : i32
    %10 = vector.broadcast %9 : i1 to vector<1x256xi1>
    %11 = vector.broadcast %10 : vector<1x256xi1> to vector<1x256xi1>
    %12 = arith.xori %8, %11 : vector<1x256xi1>
    %13 = arith.andi %12, %6 : vector<1x256xi1>
    %14 = vector.broadcast %2 : i32 to vector<1x256xi32>
    %15 = arith.addi %4, %14 : vector<1x256xi32>
    %16 = arith.select %13, %15, %4 : vector<1x256xi1>, vector<1x256xi32>
    %c0_i32_3 = arith.constant 0 : i32
    %17 = vector.broadcast %c0_i32_3 : i32 to vector<1x256xi32>
    %18 = arith.cmpi ne, %16, %17 : vector<1x256xi32>
    %c15_i32 = arith.constant 15 : i32
    %19 = vector.broadcast %c15_i32 : i32 to vector<1x256xi32>
    %20 = arith.cmpi ne, %16, %19 : vector<1x256xi32>
    %21 = tpu.iota {dimensions = array<i32: 0>} : vector<16x8xi32>
    %22 = tpu.iota {dimensions = array<i32: 1>} : vector<16x8xi32>
    %c2_i32 = arith.constant 2 : i32
    %23 = vector.broadcast %c2_i32 : i32 to vector<16x8xi32>
    %24 = arith.muli %23, %22 : vector<16x8xi32>
    %25 = arith.cmpi eq, %21, %24 : vector<16x8xi32>
    %26 = arith.extui %25 : vector<16x8xi1> to vector<16x8xi32>
    %27 = arith.sitofp %26 : vector<16x8xi32> to vector<16x8xf32>
    %cst = arith.constant 0.000000e+00 : f32
    %28 = vector.broadcast %cst : f32 to vector<8x290xf32>
    %c0 = arith.constant 0 : index
    %c0_4 = arith.constant 0 : index
    %29 = vector.load %arg7[%c0, %c0_4] : memref<8x290xf32, #tpu.memory_space<vmem>>, vector<8x290xf32>
    tpu.vector_store %arg7[%c0, %c0_4], %28 {strides = array<i32>} : memref<8x290xf32, #tpu.memory_space<vmem>>, vector<8x290xf32>,
    %c0_5 = arith.constant 0 : index
    %c0_6 = arith.constant 0 : index
    %c0_7 = arith.constant 0 : index
    %30 = vector.load %arg1[%c0_5, %c0_6, %c0_7] : memref<1x4x256xf32, #tpu.memory_space<vmem>>, vector<1x4x256xf32>
    %31 = vector.shape_cast %30 : vector<1x4x256xf32> to vector<4x256xf32>
    %c0_8 = arith.constant 0 : index
    %c17 = arith.constant 17 : index
    %32 = vector.load %arg7[%c0_8, %c17] : memref<8x290xf32, #tpu.memory_space<vmem>>, vector<4x256xf32>
    tpu.vector_store %arg7[%c0_8, %c17], %31 {strides = array<i32>} : memref<8x290xf32, #tpu.memory_space<vmem>>, vector<4x256xf32>,
    %c0_9 = arith.constant 0 : index
    %c0_10 = arith.constant 0 : index
    %33 = vector.load %arg7[%c0_9, %c0_10] : memref<8x290xf32, #tpu.memory_space<vmem>>, vector<8x256xf32>
    %cst_11 = arith.constant 0.000000e+00 : f32
    %34 = vector.shape_cast %18 : vector<1x256xi1> to vector<1x256xi1>
    %35 = vector.broadcast %34 : vector<1x256xi1> to vector<8x256xi1>
    %36 = vector.broadcast %cst_11 : f32 to vector<8x256xf32>
    %37 = arith.select %35, %33, %36 : vector<8x256xi1>, vector<8x256xf32>
    %c0_12 = arith.constant 0 : index
    %c0_13 = arith.constant 0 : index
    %38 = vector.load %arg8[%c0_12, %c0_13] : memref<72x256xf32, #tpu.memory_space<vmem>>, vector<8x256xf32>
    tpu.vector_store %arg8[%c0_12, %c0_13], %37 {strides = array<i32>} : memref<72x256xf32, #tpu.memory_space<vmem>>, vector<8x256xf32>,
    %c0_14 = arith.constant 0 : index
    %c1 = arith.constant 1 : index
    %39 = vector.load %arg7[%c0_14, %c1] : memref<8x290xf32, #tpu.memory_space<vmem>>, vector<8x256xf32>
    %c8 = arith.constant 8 : index
    %c0_15 = arith.constant 0 : index
    %40 = vector.load %arg8[%c8, %c0_15] : memref<72x256xf32, #tpu.memory_space<vmem>>, vector<8x256xf32>
    tpu.vector_store %arg8[%c8, %c0_15], %39 {strides = array<i32>} : memref<72x256xf32, #tpu.memory_space<vmem>>, vector<8x256xf32>,
    %c0_16 = arith.constant 0 : index
    %c2 = arith.constant 2 : index
    %41 = vector.load %arg7[%c0_16, %c2] : memref<8x290xf32, #tpu.memory_space<vmem>>, vector<8x256xf32>
    %cst_17 = arith.constant 0.000000e+00 : f32
    %42 = vector.shape_cast %20 : vector<1x256xi1> to vector<1x256xi1>
    %43 = vector.broadcast %42 : vector<1x256xi1> to vector<8x256xi1>
    %44 = vector.broadcast %cst_17 : f32 to vector<8x256xf32>
    %45 = arith.select %43, %41, %44 : vector<8x256xi1>, vector<8x256xf32>
    %c16 = arith.constant 16 : index
    %c0_18 = arith.constant 0 : index
    %46 = vector.load %arg8[%c16, %c0_18] : memref<72x256xf32, #tpu.memory_space<vmem>>, vector<8x256xf32>
    tpu.vector_store %arg8[%c16, %c0_18], %45 {strides = array<i32>} : memref<72x256xf32, #tpu.memory_space<vmem>>, vector<8x256xf32>,
    %c0_19 = arith.constant 0 : index
    %c16_20 = arith.constant 16 : index
    %47 = vector.load %arg7[%c0_19, %c16_20] : memref<8x290xf32, #tpu.memory_space<vmem>>, vector<8x256xf32>
    %cst_21 = arith.constant 0.000000e+00 : f32
    %48 = vector.shape_cast %18 : vector<1x256xi1> to vector<1x256xi1>
    %49 = vector.broadcast %48 : vector<1x256xi1> to vector<8x256xi1>
    %50 = vector.broadcast %cst_21 : f32 to vector<8x256xf32>
    %51 = arith.select %49, %47, %50 : vector<8x256xi1>, vector<8x256xf32>
    %c24 = arith.constant 24 : index
    %c0_22 = arith.constant 0 : index
    %52 = vector.load %arg8[%c24, %c0_22] : memref<72x256xf32, #tpu.memory_space<vmem>>, vector<8x256xf32>
    tpu.vector_store %arg8[%c24, %c0_22], %51 {strides = array<i32>} : memref<72x256xf32, #tpu.memory_space<vmem>>, vector<8x256xf32>,
    %c0_23 = arith.constant 0 : index
    %c17_24 = arith.constant 17 : index
    %53 = vector.load %arg7[%c0_23, %c17_24] : memref<8x290xf32, #tpu.memory_space<vmem>>, vector<8x256xf32>
    %c32 = arith.constant 32 : index
    %c0_25 = arith.constant 0 : index
    %54 = vector.load %arg8[%c32, %c0_25] : memref<72x256xf32, #tpu.memory_space<vmem>>, vector<8x256xf32>
    tpu.vector_store %arg8[%c32, %c0_25], %53 {strides = array<i32>} : memref<72x256xf32, #tpu.memory_space<vmem>>, vector<8x256xf32>,
    %c0_26 = arith.constant 0 : index
    %c18 = arith.constant 18 : index
    %55 = vector.load %arg7[%c0_26, %c18] : memref<8x290xf32, #tpu.memory_space<vmem>>, vector<8x256xf32>
    %cst_27 = arith.constant 0.000000e+00 : f32
    %56 = vector.shape_cast %20 : vector<1x256xi1> to vector<1x256xi1>
    %57 = vector.broadcast %56 : vector<1x256xi1> to vector<8x256xi1>
    %58 = vector.broadcast %cst_27 : f32 to vector<8x256xf32>
    %59 = arith.select %57, %55, %58 : vector<8x256xi1>, vector<8x256xf32>
    %c40 = arith.constant 40 : index
    %c0_28 = arith.constant 0 : index
    %60 = vector.load %arg8[%c40, %c0_28] : memref<72x256xf32, #tpu.memory_space<vmem>>, vector<8x256xf32>
    tpu.vector_store %arg8[%c40, %c0_28], %59 {strides = array<i32>} : memref<72x256xf32, #tpu.memory_space<vmem>>, vector<8x256xf32>,
    %c0_29 = arith.constant 0 : index
    %c32_30 = arith.constant 32 : index
    %61 = vector.load %arg7[%c0_29, %c32_30] : memref<8x290xf32, #tpu.memory_space<vmem>>, vector<8x256xf32>
    %cst_31 = arith.constant 0.000000e+00 : f32
    %62 = vector.shape_cast %18 : vector<1x256xi1> to vector<1x256xi1>
    %63 = vector.broadcast %62 : vector<1x256xi1> to vector<8x256xi1>
    %64 = vector.broadcast %cst_31 : f32 to vector<8x256xf32>
    %65 = arith.select %63, %61, %64 : vector<8x256xi1>, vector<8x256xf32>
    %c48 = arith.constant 48 : index
    %c0_32 = arith.constant 0 : index
    %66 = vector.load %arg8[%c48, %c0_32] : memref<72x256xf32, #tpu.memory_space<vmem>>, vector<8x256xf32>
    tpu.vector_store %arg8[%c48, %c0_32], %65 {strides = array<i32>} : memref<72x256xf32, #tpu.memory_space<vmem>>, vector<8x256xf32>,
    %c0_33 = arith.constant 0 : index
    %c33 = arith.constant 33 : index
    %67 = vector.load %arg7[%c0_33, %c33] : memref<8x290xf32, #tpu.memory_space<vmem>>, vector<8x256xf32>
    %c56 = arith.constant 56 : index
    %c0_34 = arith.constant 0 : index
    %68 = vector.load %arg8[%c56, %c0_34] : memref<72x256xf32, #tpu.memory_space<vmem>>, vector<8x256xf32>
    tpu.vector_store %arg8[%c56, %c0_34], %67 {strides = array<i32>} : memref<72x256xf32, #tpu.memory_space<vmem>>, vector<8x256xf32>,
    %c0_35 = arith.constant 0 : index
    %c34 = arith.constant 34 : index
    %69 = vector.load %arg7[%c0_35, %c34] : memref<8x290xf32, #tpu.memory_space<vmem>>, vector<8x256xf32>
    %cst_36 = arith.constant 0.000000e+00 : f32
    %70 = vector.shape_cast %20 : vector<1x256xi1> to vector<1x256xi1>
    %71 = vector.broadcast %70 : vector<1x256xi1> to vector<8x256xi1>
    %72 = vector.broadcast %cst_36 : f32 to vector<8x256xf32>
    %73 = arith.select %71, %69, %72 : vector<8x256xi1>, vector<8x256xf32>
    %c64 = arith.constant 64 : index
    %c0_37 = arith.constant 0 : index
    %74 = vector.load %arg8[%c64, %c0_37] : memref<72x256xf32, #tpu.memory_space<vmem>>, vector<8x256xf32>
    tpu.vector_store %arg8[%c64, %c0_37], %73 {strides = array<i32>} : memref<72x256xf32, #tpu.memory_space<vmem>>, vector<8x256xf32>,
    %c0_38 = arith.constant 0 : index
    %c0_39 = arith.constant 0 : index
    %75 = vector.load %arg2[%c0_38, %c0_39] : memref<8x72xf32, #tpu.memory_space<vmem>>, vector<8x72xf32>
    %c0_40 = arith.constant 0 : index
    %c0_41 = arith.constant 0 : index
    %76 = vector.load %arg8[%c0_40, %c0_41] : memref<72x256xf32, #tpu.memory_space<vmem>>, vector<72x256xf32>
    %cst_42 = arith.constant dense<0.000000e+00> : vector<8x256xf32>
    %77 = tpu.matmul %75, %76, %cst_42 {dimension_numbers = #tpu.dot_dimension_numbers<[1], [0], [0], [1], [0, 0, 1, 1], [], []>} : vector<8x72xf32>, vector<72x256xf32>, vector<8x256xf32> -> vector<8x256xf32>
    %c0_43 = arith.constant 0 : index
    %c0_44 = arith.constant 0 : index
    %78 = vector.load %arg3[%c0_43, %c0_44] : memref<8x1xf32, #tpu.memory_space<vmem>>, vector<8x1xf32>
    %79 = vector.broadcast %78 : vector<8x1xf32> to vector<8x256xf32>
    %80 = arith.addf %77, %79 : vector<8x256xf32>
    %cst_45 = arith.constant 0.000000e+00 : f32
    %81 = vector.broadcast %cst_45 : f32 to vector<8x256xf32>
    %82 = arith.maximumf %80, %81 : vector<8x256xf32>
    %c0_46 = arith.constant 0 : index
    %c17_47 = arith.constant 17 : index
    %83 = vector.load %arg7[%c0_46, %c17_47] : memref<8x290xf32, #tpu.memory_space<vmem>>, vector<8x256xf32>
    tpu.vector_store %arg7[%c0_46, %c17_47], %82 {strides = array<i32>} : memref<8x290xf32, #tpu.memory_space<vmem>>, vector<8x256xf32>,
    %c0_48 = arith.constant 0 : index
    %c0_49 = arith.constant 0 : index
    %84 = vector.load %arg7[%c0_48, %c0_49] : memref<8x290xf32, #tpu.memory_space<vmem>>, vector<8x256xf32>
    %cst_50 = arith.constant 0.000000e+00 : f32
    %85 = vector.shape_cast %18 : vector<1x256xi1> to vector<1x256xi1>
    %86 = vector.broadcast %85 : vector<1x256xi1> to vector<8x256xi1>
    %87 = vector.broadcast %cst_50 : f32 to vector<8x256xf32>
    %88 = arith.select %86, %84, %87 : vector<8x256xi1>, vector<8x256xf32>
    %c0_51 = arith.constant 0 : index
    %c0_52 = arith.constant 0 : index
    %89 = vector.load %arg8[%c0_51, %c0_52] : memref<72x256xf32, #tpu.memory_space<vmem>>, vector<8x256xf32>
    tpu.vector_store %arg8[%c0_51, %c0_52], %88 {strides = array<i32>} : memref<72x256xf32, #tpu.memory_space<vmem>>, vector<8x256xf32>,
    %c0_53 = arith.constant 0 : index
    %c1_54 = arith.constant 1 : index
    %90 = vector.load %arg7[%c0_53, %c1_54] : memref<8x290xf32, #tpu.memory_space<vmem>>, vector<8x256xf32>
    %c8_55 = arith.constant 8 : index
    %c0_56 = arith.constant 0 : index
    %91 = vector.load %arg8[%c8_55, %c0_56] : memref<72x256xf32, #tpu.memory_space<vmem>>, vector<8x256xf32>
    tpu.vector_store %arg8[%c8_55, %c0_56], %90 {strides = array<i32>} : memref<72x256xf32, #tpu.memory_space<vmem>>, vector<8x256xf32>,
    %c0_57 = arith.constant 0 : index
    %c2_58 = arith.constant 2 : index
    %92 = vector.load %arg7[%c0_57, %c2_58] : memref<8x290xf32, #tpu.memory_space<vmem>>, vector<8x256xf32>
    %cst_59 = arith.constant 0.000000e+00 : f32
    %93 = vector.shape_cast %20 : vector<1x256xi1> to vector<1x256xi1>
    %94 = vector.broadcast %93 : vector<1x256xi1> to vector<8x256xi1>
    %95 = vector.broadcast %cst_59 : f32 to vector<8x256xf32>
    %96 = arith.select %94, %92, %95 : vector<8x256xi1>, vector<8x256xf32>
    %c16_60 = arith.constant 16 : index
    %c0_61 = arith.constant 0 : index
    %97 = vector.load %arg8[%c16_60, %c0_61] : memref<72x256xf32, #tpu.memory_space<vmem>>, vector<8x256xf32>
    tpu.vector_store %arg8[%c16_60, %c0_61], %96 {strides = array<i32>} : memref<72x256xf32, #tpu.memory_space<vmem>>, vector<8x256xf32>,
    %c0_62 = arith.constant 0 : index
    %c16_63 = arith.constant 16 : index
    %98 = vector.load %arg7[%c0_62, %c16_63] : memref<8x290xf32, #tpu.memory_space<vmem>>, vector<8x256xf32>
    %cst_64 = arith.constant 0.000000e+00 : f32
    %99 = vector.shape_cast %18 : vector<1x256xi1> to vector<1x256xi1>
    %100 = vector.broadcast %99 : vector<1x256xi1> to vector<8x256xi1>
    %101 = vector.broadcast %cst_64 : f32 to vector<8x256xf32>
    %102 = arith.select %100, %98, %101 : vector<8x256xi1>, vector<8x256xf32>
    %c24_65 = arith.constant 24 : index
    %c0_66 = arith.constant 0 : index
    %103 = vector.load %arg8[%c24_65, %c0_66] : memref<72x256xf32, #tpu.memory_space<vmem>>, vector<8x256xf32>
    tpu.vector_store %arg8[%c24_65, %c0_66], %102 {strides = array<i32>} : memref<72x256xf32, #tpu.memory_space<vmem>>, vector<8x256xf32>,
    %c0_67 = arith.constant 0 : index
    %c17_68 = arith.constant 17 : index
    %104 = vector.load %arg7[%c0_67, %c17_68] : memref<8x290xf32, #tpu.memory_space<vmem>>, vector<8x256xf32>
    %c32_69 = arith.constant 32 : index
    %c0_70 = arith.constant 0 : index
    %105 = vector.load %arg8[%c32_69, %c0_70] : memref<72x256xf32, #tpu.memory_space<vmem>>, vector<8x256xf32>
    tpu.vector_store %arg8[%c32_69, %c0_70], %104 {strides = array<i32>} : memref<72x256xf32, #tpu.memory_space<vmem>>, vector<8x256xf32>,
    %c0_71 = arith.constant 0 : index
    %c18_72 = arith.constant 18 : index
    %106 = vector.load %arg7[%c0_71, %c18_72] : memref<8x290xf32, #tpu.memory_space<vmem>>, vector<8x256xf32>
    %cst_73 = arith.constant 0.000000e+00 : f32
    %107 = vector.shape_cast %20 : vector<1x256xi1> to vector<1x256xi1>
    %108 = vector.broadcast %107 : vector<1x256xi1> to vector<8x256xi1>
    %109 = vector.broadcast %cst_73 : f32 to vector<8x256xf32>
    %110 = arith.select %108, %106, %109 : vector<8x256xi1>, vector<8x256xf32>
    %c40_74 = arith.constant 40 : index
    %c0_75 = arith.constant 0 : index
    %111 = vector.load %arg8[%c40_74, %c0_75] : memref<72x256xf32, #tpu.memory_space<vmem>>, vector<8x256xf32>
    tpu.vector_store %arg8[%c40_74, %c0_75], %110 {strides = array<i32>} : memref<72x256xf32, #tpu.memory_space<vmem>>, vector<8x256xf32>,
    %c0_76 = arith.constant 0 : index
    %c32_77 = arith.constant 32 : index
    %112 = vector.load %arg7[%c0_76, %c32_77] : memref<8x290xf32, #tpu.memory_space<vmem>>, vector<8x256xf32>
    %cst_78 = arith.constant 0.000000e+00 : f32
    %113 = vector.shape_cast %18 : vector<1x256xi1> to vector<1x256xi1>
    %114 = vector.broadcast %113 : vector<1x256xi1> to vector<8x256xi1>
    %115 = vector.broadcast %cst_78 : f32 to vector<8x256xf32>
    %116 = arith.select %114, %112, %115 : vector<8x256xi1>, vector<8x256xf32>
    %c48_79 = arith.constant 48 : index
    %c0_80 = arith.constant 0 : index
    %117 = vector.load %arg8[%c48_79, %c0_80] : memref<72x256xf32, #tpu.memory_space<vmem>>, vector<8x256xf32>
    tpu.vector_store %arg8[%c48_79, %c0_80], %116 {strides = array<i32>} : memref<72x256xf32, #tpu.memory_space<vmem>>, vector<8x256xf32>,
    %c0_81 = arith.constant 0 : index
    %c33_82 = arith.constant 33 : index
    %118 = vector.load %arg7[%c0_81, %c33_82] : memref<8x290xf32, #tpu.memory_space<vmem>>, vector<8x256xf32>
    %c56_83 = arith.constant 56 : index
    %c0_84 = arith.constant 0 : index
    %119 = vector.load %arg8[%c56_83, %c0_84] : memref<72x256xf32, #tpu.memory_space<vmem>>, vector<8x256xf32>
    tpu.vector_store %arg8[%c56_83, %c0_84], %118 {strides = array<i32>} : memref<72x256xf32, #tpu.memory_space<vmem>>, vector<8x256xf32>,
    %c0_85 = arith.constant 0 : index
    %c34_86 = arith.constant 34 : index
    %120 = vector.load %arg7[%c0_85, %c34_86] : memref<8x290xf32, #tpu.memory_space<vmem>>, vector<8x256xf32>
    %cst_87 = arith.constant 0.000000e+00 : f32
    %121 = vector.shape_cast %20 : vector<1x256xi1> to vector<1x256xi1>
    %122 = vector.broadcast %121 : vector<1x256xi1> to vector<8x256xi1>
    %123 = vector.broadcast %cst_87 : f32 to vector<8x256xf32>
    %124 = arith.select %122, %120, %123 : vector<8x256xi1>, vector<8x256xf32>
    %c64_88 = arith.constant 64 : index
    %c0_89 = arith.constant 0 : index
    %125 = vector.load %arg8[%c64_88, %c0_89] : memref<72x256xf32, #tpu.memory_space<vmem>>, vector<8x256xf32>
    tpu.vector_store %arg8[%c64_88, %c0_89], %124 {strides = array<i32>} : memref<72x256xf32, #tpu.memory_space<vmem>>, vector<8x256xf32>,
    %c0_90 = arith.constant 0 : index
    %c0_91 = arith.constant 0 : index
    %126 = vector.load %arg4[%c0_90, %c0_91] : memref<8x72xf32, #tpu.memory_space<vmem>>, vector<8x72xf32>
    %c0_92 = arith.constant 0 : index
    %c0_93 = arith.constant 0 : index
    %127 = vector.load %arg8[%c0_92, %c0_93] : memref<72x256xf32, #tpu.memory_space<vmem>>, vector<72x256xf32>
    %cst_94 = arith.constant dense<0.000000e+00> : vector<8x256xf32>
    %128 = tpu.matmul %126, %127, %cst_94 {dimension_numbers = #tpu.dot_dimension_numbers<[1], [0], [0], [1], [0, 0, 1, 1], [], []>} : vector<8x72xf32>, vector<72x256xf32>, vector<8x256xf32> -> vector<8x256xf32>
    %c0_95 = arith.constant 0 : index
    %c0_96 = arith.constant 0 : index
    %129 = vector.load %arg5[%c0_95, %c0_96] : memref<8x1xf32, #tpu.memory_space<vmem>>, vector<8x1xf32>
    %130 = vector.broadcast %129 : vector<8x1xf32> to vector<8x256xf32>
    %131 = arith.addf %128, %130 : vector<8x256xf32>
    %cst_97 = arith.constant 0.000000e+00 : f32
    %132 = vector.broadcast %cst_97 : f32 to vector<8x256xf32>
    %133 = arith.maximumf %131, %132 : vector<8x256xf32>
    %c0_98 = arith.constant 0 : index
    %c17_99 = arith.constant 17 : index
    %134 = vector.load %arg7[%c0_98, %c17_99] : memref<8x290xf32, #tpu.memory_space<vmem>>, vector<8x256xf32>
    tpu.vector_store %arg7[%c0_98, %c17_99], %133 {strides = array<i32>} : memref<8x290xf32, #tpu.memory_space<vmem>>, vector<8x256xf32>,
    %c0_100 = arith.constant 0 : index
    %c17_101 = arith.constant 17 : index
    %135 = vector.load %arg7[%c0_100, %c17_101] : memref<8x290xf32, #tpu.memory_space<vmem>>, vector<8x256xf32>
    %c0_102 = arith.constant 0 : index
    %c18_103 = arith.constant 18 : index
    %136 = vector.load %arg7[%c0_102, %c18_103] : memref<8x290xf32, #tpu.memory_space<vmem>>, vector<8x256xf32>
    %c0_104 = arith.constant 0 : index
    %c33_105 = arith.constant 33 : index
    %137 = vector.load %arg7[%c0_104, %c33_105] : memref<8x290xf32, #tpu.memory_space<vmem>>, vector<8x256xf32>
    %c0_106 = arith.constant 0 : index
    %c34_107 = arith.constant 34 : index
    %138 = vector.load %arg7[%c0_106, %c34_107] : memref<8x290xf32, #tpu.memory_space<vmem>>, vector<8x256xf32>
    %139 = arith.maximumf %135, %136 : vector<8x256xf32>
    %140 = arith.maximumf %137, %138 : vector<8x256xf32>
    %141 = arith.maximumf %139, %140 : vector<8x256xf32>
    %142 = vector.extract_strided_slice %141 {offsets = [0, 0], sizes = [8, 16], strides = [1, 1]} : vector<8x256xf32> to vector<8x16xf32>
    %cst_108 = arith.constant dense<0.000000e+00> : vector<8x8xf32>
    %143 = tpu.matmul %142, %27, %cst_108 {dimension_numbers = #tpu.dot_dimension_numbers<[1], [0], [0], [1], [0, 0, 1, 1], [], []>} : vector<8x16xf32>, vector<16x8xf32>, vector<8x8xf32> -> vector<8x8xf32>
    %c0_109 = arith.constant 0 : index
    %c0_110 = arith.constant 0 : index
    %c0_111 = arith.constant 0 : index
    %144 = vector.load %arg6[%c0_109, %c0_110, %c0_111] : memref<1x8x64xf32, #tpu.memory_space<vmem>>, vector<1x8x8xf32>
    %145 = vector.shape_cast %144 : vector<1x8x8xf32> to vector<8x8xf32>
    %146 = vector.shape_cast %143 : vector<8x8xf32> to vector<1x8x8xf32>
    tpu.vector_store %arg6[%c0_109, %c0_110, %c0_111], %146 {strides = array<i32>} : memref<1x8x64xf32, #tpu.memory_space<vmem>>, vector<1x8x8xf32>,
    %147 = vector.extract_strided_slice %141 {offsets = [0, 32], sizes = [8, 16], strides = [1, 1]} : vector<8x256xf32> to vector<8x16xf32>
    %cst_112 = arith.constant dense<0.000000e+00> : vector<8x8xf32>
    %148 = tpu.matmul %147, %27, %cst_112 {dimension_numbers = #tpu.dot_dimension_numbers<[1], [0], [0], [1], [0, 0, 1, 1], [], []>} : vector<8x16xf32>, vector<16x8xf32>, vector<8x8xf32> -> vector<8x8xf32>
    %c0_113 = arith.constant 0 : index
    %c0_114 = arith.constant 0 : index
    %c8_115 = arith.constant 8 : index
    %149 = vector.load %arg6[%c0_113, %c0_114, %c8_115] : memref<1x8x64xf32, #tpu.memory_space<vmem>>, vector<1x8x8xf32>
    %150 = vector.shape_cast %149 : vector<1x8x8xf32> to vector<8x8xf32>
    %151 = vector.shape_cast %148 : vector<8x8xf32> to vector<1x8x8xf32>
    tpu.vector_store %arg6[%c0_113, %c0_114, %c8_115], %151 {strides = array<i32>} : memref<1x8x64xf32, #tpu.memory_space<vmem>>, vector<1x8x8xf32>,
    %152 = vector.extract_strided_slice %141 {offsets = [0, 64], sizes = [8, 16], strides = [1, 1]} : vector<8x256xf32> to vector<8x16xf32>
    %cst_116 = arith.constant dense<0.000000e+00> : vector<8x8xf32>
    %153 = tpu.matmul %152, %27, %cst_116 {dimension_numbers = #tpu.dot_dimension_numbers<[1], [0], [0], [1], [0, 0, 1, 1], [], []>} : vector<8x16xf32>, vector<16x8xf32>, vector<8x8xf32> -> vector<8x8xf32>
    %c0_117 = arith.constant 0 : index
    %c0_118 = arith.constant 0 : index
    %c16_119 = arith.constant 16 : index
    %154 = vector.load %arg6[%c0_117, %c0_118, %c16_119] : memref<1x8x64xf32, #tpu.memory_space<vmem>>, vector<1x8x8xf32>
    %155 = vector.shape_cast %154 : vector<1x8x8xf32> to vector<8x8xf32>
    %156 = vector.shape_cast %153 : vector<8x8xf32> to vector<1x8x8xf32>
    tpu.vector_store %arg6[%c0_117, %c0_118, %c16_119], %156 {strides = array<i32>} : memref<1x8x64xf32, #tpu.memory_space<vmem>>, vector<1x8x8xf32>,
    %157 = vector.extract_strided_slice %141 {offsets = [0, 96], sizes = [8, 16], strides = [1, 1]} : vector<8x256xf32> to vector<8x16xf32>
    %cst_120 = arith.constant dense<0.000000e+00> : vector<8x8xf32>
    %158 = tpu.matmul %157, %27, %cst_120 {dimension_numbers = #tpu.dot_dimension_numbers<[1], [0], [0], [1], [0, 0, 1, 1], [], []>} : vector<8x16xf32>, vector<16x8xf32>, vector<8x8xf32> -> vector<8x8xf32>
    %c0_121 = arith.constant 0 : index
    %c0_122 = arith.constant 0 : index
    %c24_123 = arith.constant 24 : index
    %159 = vector.load %arg6[%c0_121, %c0_122, %c24_123] : memref<1x8x64xf32, #tpu.memory_space<vmem>>, vector<1x8x8xf32>
    %160 = vector.shape_cast %159 : vector<1x8x8xf32> to vector<8x8xf32>
    %161 = vector.shape_cast %158 : vector<8x8xf32> to vector<1x8x8xf32>
    tpu.vector_store %arg6[%c0_121, %c0_122, %c24_123], %161 {strides = array<i32>} : memref<1x8x64xf32, #tpu.memory_space<vmem>>, vector<1x8x8xf32>,
    %162 = vector.extract_strided_slice %141 {offsets = [0, 128], sizes = [8, 16], strides = [1, 1]} : vector<8x256xf32> to vector<8x16xf32>
    %cst_124 = arith.constant dense<0.000000e+00> : vector<8x8xf32>
    %163 = tpu.matmul %162, %27, %cst_124 {dimension_numbers = #tpu.dot_dimension_numbers<[1], [0], [0], [1], [0, 0, 1, 1], [], []>} : vector<8x16xf32>, vector<16x8xf32>, vector<8x8xf32> -> vector<8x8xf32>
    %c0_125 = arith.constant 0 : index
    %c0_126 = arith.constant 0 : index
    %c32_127 = arith.constant 32 : index
    %164 = vector.load %arg6[%c0_125, %c0_126, %c32_127] : memref<1x8x64xf32, #tpu.memory_space<vmem>>, vector<1x8x8xf32>
    %165 = vector.shape_cast %164 : vector<1x8x8xf32> to vector<8x8xf32>
    %166 = vector.shape_cast %163 : vector<8x8xf32> to vector<1x8x8xf32>
    tpu.vector_store %arg6[%c0_125, %c0_126, %c32_127], %166 {strides = array<i32>} : memref<1x8x64xf32, #tpu.memory_space<vmem>>, vector<1x8x8xf32>,
    %167 = vector.extract_strided_slice %141 {offsets = [0, 160], sizes = [8, 16], strides = [1, 1]} : vector<8x256xf32> to vector<8x16xf32>
    %cst_128 = arith.constant dense<0.000000e+00> : vector<8x8xf32>
    %168 = tpu.matmul %167, %27, %cst_128 {dimension_numbers = #tpu.dot_dimension_numbers<[1], [0], [0], [1], [0, 0, 1, 1], [], []>} : vector<8x16xf32>, vector<16x8xf32>, vector<8x8xf32> -> vector<8x8xf32>
    %c0_129 = arith.constant 0 : index
    %c0_130 = arith.constant 0 : index
    %c40_131 = arith.constant 40 : index
    %169 = vector.load %arg6[%c0_129, %c0_130, %c40_131] : memref<1x8x64xf32, #tpu.memory_space<vmem>>, vector<1x8x8xf32>
    %170 = vector.shape_cast %169 : vector<1x8x8xf32> to vector<8x8xf32>
    %171 = vector.shape_cast %168 : vector<8x8xf32> to vector<1x8x8xf32>
    tpu.vector_store %arg6[%c0_129, %c0_130, %c40_131], %171 {strides = array<i32>} : memref<1x8x64xf32, #tpu.memory_space<vmem>>, vector<1x8x8xf32>,
    %172 = vector.extract_strided_slice %141 {offsets = [0, 192], sizes = [8, 16], strides = [1, 1]} : vector<8x256xf32> to vector<8x16xf32>
    %cst_132 = arith.constant dense<0.000000e+00> : vector<8x8xf32>
    %173 = tpu.matmul %172, %27, %cst_132 {dimension_numbers = #tpu.dot_dimension_numbers<[1], [0], [0], [1], [0, 0, 1, 1], [], []>} : vector<8x16xf32>, vector<16x8xf32>, vector<8x8xf32> -> vector<8x8xf32>
    %c0_133 = arith.constant 0 : index
    %c0_134 = arith.constant 0 : index
    %c48_135 = arith.constant 48 : index
    %174 = vector.load %arg6[%c0_133, %c0_134, %c48_135] : memref<1x8x64xf32, #tpu.memory_space<vmem>>, vector<1x8x8xf32>
    %175 = vector.shape_cast %174 : vector<1x8x8xf32> to vector<8x8xf32>
    %176 = vector.shape_cast %173 : vector<8x8xf32> to vector<1x8x8xf32>
    tpu.vector_store %arg6[%c0_133, %c0_134, %c48_135], %176 {strides = array<i32>} : memref<1x8x64xf32, #tpu.memory_space<vmem>>, vector<1x8x8xf32>,
    %177 = vector.extract_strided_slice %141 {offsets = [0, 224], sizes = [8, 16], strides = [1, 1]} : vector<8x256xf32> to vector<8x16xf32>
    %cst_136 = arith.constant dense<0.000000e+00> : vector<8x8xf32>
    %178 = tpu.matmul %177, %27, %cst_136 {dimension_numbers = #tpu.dot_dimension_numbers<[1], [0], [0], [1], [0, 0, 1, 1], [], []>} : vector<8x16xf32>, vector<16x8xf32>, vector<8x8xf32> -> vector<8x8xf32>
    %c0_137 = arith.constant 0 : index
    %c0_138 = arith.constant 0 : index
    %c56_139 = arith.constant 56 : index
    %179 = vector.load %arg6[%c0_137, %c0_138, %c56_139] : memref<1x8x64xf32, #tpu.memory_space<vmem>>, vector<1x8x8xf32>
    %180 = vector.shape_cast %179 : vector<1x8x8xf32> to vector<8x8xf32>
    %181 = vector.shape_cast %178 : vector<8x8xf32> to vector<1x8x8xf32>
    tpu.vector_store %arg6[%c0_137, %c0_138, %c56_139], %181 {strides = array<i32>} : memref<1x8x64xf32, #tpu.memory_space<vmem>>, vector<1x8x8xf32>,
    return
  }
  func.func @transform_0(%arg0: i32) -> (i32, i32, i32) {
    %c0_i32 = arith.constant 0 : i32
    %c0_i32_0 = arith.constant 0 : i32
    %c0_i32_1 = arith.constant 0 : i32
    return %arg0, %c0_i32, %c0_i32_0 : i32, i32, i32
  }
  func.func @transform_1(%arg0: i32) -> (i32, i32) {
    %c0_i32 = arith.constant 0 : i32
    %c0_i32_0 = arith.constant 0 : i32
    %c0_i32_1 = arith.constant 0 : i32
    return %c0_i32, %c0_i32_0 : i32, i32
  }
  func.func @transform_2(%arg0: i32) -> (i32, i32) {
    %c0_i32 = arith.constant 0 : i32
    %c0_i32_0 = arith.constant 0 : i32
    %c0_i32_1 = arith.constant 0 : i32
    return %c0_i32, %c0_i32_0 : i32, i32
  }
  func.func @transform_3(%arg0: i32) -> (i32, i32) {
    %c0_i32 = arith.constant 0 : i32
    %c0_i32_0 = arith.constant 0 : i32
    %c0_i32_1 = arith.constant 0 : i32
    return %c0_i32, %c0_i32_0 : i32, i32
  }
  func.func @transform_4(%arg0: i32) -> (i32, i32) {
    %c0_i32 = arith.constant 0 : i32
    %c0_i32_0 = arith.constant 0 : i32
    %c0_i32_1 = arith.constant 0 : i32
    return %c0_i32, %c0_i32_0 : i32, i32
  }
  func.func @transform_5(%arg0: i32) -> (i32, i32, i32) {
    %c0_i32 = arith.constant 0 : i32
    %c0_i32_0 = arith.constant 0 : i32
    %c0_i32_1 = arith.constant 0 : i32
    return %arg0, %c0_i32, %c0_i32_0 : i32, i32, i32
  }
}

</mosaic_0001>

<llo_original>
// kernel: conv_block_base.1
$region0: #{conv_block_base.1}
  #allocation0 [shape = 'u32[]', space=smem, size = 0x4, offset = 0x4, fixed_abs, tag = 'smem constant byte address 0x4 - core index']
  #allocation1 [shape = 'u32[144,128]{1,0:T(1,128)}', space=vmem, size = 0x12000, scoped, tag = 'internal scratch']
  #allocation2 [shape = 'f32[8,290]{1,0:T(8,128)}', space=vmem, size = 0x3000, scoped, tag = 'scratch operand']
  #allocation3 [shape = 'f32[72,256]{1,0:T(8,128)}', space=vmem, size = 0x12000, scoped, tag = 'scratch operand']
  %s0 = inlined_call_operand.vmem [shape: f32[2,4,256], index: 0, kind: input, shape index: {}]
  %s1 = inlined_call_operand.vmem [shape: f32[8,72], index: 1, kind: input, shape index: {}]
  %s2 = inlined_call_operand.vmem [shape: f32[8,1], index: 2, kind: input, shape index: {}]
  %s3 = inlined_call_operand.vmem [shape: f32[8,72], index: 3, kind: input, shape index: {}]
  %s4 = inlined_call_operand.vmem [shape: f32[8,1], index: 4, kind: input, shape index: {}]
  %s5 = inlined_call_operand.vmem [shape: f32[2,8,64], index: 5, kind: output, shape index: {}]
  %s6 = sld [smem:[#allocation0]]
  $region53: #{conv_block_base.1} parent=0
    _
  %s8 = ssub.s32 1, %s6
  %s9 = scalar_select 0, %s8, %s6
  loop: start=0, step=1, limit=4
  $region2: #{conv_block_base.1} parent=0 // loop_pre_header
    _
  $region3: #{conv_block_base.1} parent=0 // loop_header
    %s11 = sphi 0, %s15
    %p12 = scmp.ge.s32.totalorder %s11, 4
    %s21 = sphi 0, %s23
    %s24 = sphi 0, %s21
    %s25 = sphi 0, %s24
    %s41 = sphi 0, %s25
    %s45 = sphi 0, %s45
    %s47 = sphi 0, %s45
    %s48 = sphi 0, %s47
    %s62 = sphi 0, %s48
    %s66 = sphi 0, %s66
    %s68 = sphi 0, %s66
    %s69 = sphi 0, %s68
    %s83 = sphi 0, %s69
    %s87 = sphi 0, %s87
    %s89 = sphi 0, %s87
    %s90 = sphi 0, %s89
    %s104 = sphi 0, %s90
    %s108 = sphi 0, %s108
    %s110 = sphi 0, %s108
    %s111 = sphi 0, %s110
    %s125 = sphi 0, %s111
    %s131 = sphi 0, %s133
    %s134 = sphi 0, %s131
    %s135 = sphi 0, %s134
    %s151 = sphi 0, %s135
  $region4: #{conv_block_base.1} parent=0 // loop_header_branch
    %14 = sbr.rel (%p12) target = $region8
  $region5: #{conv_block_base.1} parent=0 // loop_body
    %s16 = ssub.s32 %s11, 1
    %s17 = ssub.s32 %s11, 2
    %s18 = sadd.s32 %s11, 1
    %s19 = ssub.s32 %s11, %s18
    %p20 = scmp.eq.s32.totalorder %s19, 0
    %s22 = sadd.s32 %s21, 1
    %s23 = scalar_select %p20, %s21, %s22
    %p26 = pneg %p20
    %p27 = scmp.eq.s32.totalorder %s11, 1
    %p28 = por %p26, %p27
    %p29 = scmp.ne.s32.totalorder %s21, %s24
    %p30 = scmp.eq.s32.totalorder %s11, 0
    %p31 = por %p29, %p30
    %p32 = scmp.ne.s32.totalorder %s21, %s24
    %p33 = scmp.eq.s32.totalorder %s16, 1
    %p34 = por %p32, %p33
    %p35 = scmp.ne.s32.totalorder %s24, %s25
    %p36 = scmp.eq.s32.totalorder %s16, 0
    %p37 = por %p35, %p36
    %p38 = scmp.ne.s32.totalorder %s24, %s25
    %p39 = scmp.eq.s32.totalorder %s17, 1
    %p40 = por %p38, %p39
    %p42 = scmp.ne.s32.totalorder %s25, %s41
    %p43 = scmp.eq.s32.totalorder %s17, 0
    %p44 = por %p42, %p43
    %s46 = sadd.s32 %s45, 1
    %p49 = scmp.eq.s32.totalorder %s11, 1
    %p50 = scmp.ne.s32.totalorder %s45, %s47
    %p51 = scmp.eq.s32.totalorder %s11, 0
    %p52 = por %p50, %p51
    %p53 = scmp.ne.s32.totalorder %s45, %s47
    %p54 = scmp.eq.s32.totalorder %s16, 1
    %p55 = por %p53, %p54
    %p56 = scmp.ne.s32.totalorder %s47, %s48
    %p57 = scmp.eq.s32.totalorder %s16, 0
    %p58 = por %p56, %p57
    %p59 = scmp.ne.s32.totalorder %s47, %s48
    %p60 = scmp.eq.s32.totalorder %s17, 1
    %p61 = por %p59, %p60
    %p63 = scmp.ne.s32.totalorder %s48, %s62
    %p64 = scmp.eq.s32.totalorder %s17, 0
    %p65 = por %p63, %p64
    %s67 = sadd.s32 %s66, 1
    %p70 = scmp.eq.s32.totalorder %s11, 1
    %p71 = scmp.ne.s32.totalorder %s66, %s68
    %p72 = scmp.eq.s32.totalorder %s11, 0
    %p73 = por %p71, %p72
    %p74 = scmp.ne.s32.totalorder %s66, %s68
    %p75 = scmp.eq.s32.totalorder %s16, 1
    %p76 = por %p74, %p75
    %p77 = scmp.ne.s32.totalorder %s68, %s69
    %p78 = scmp.eq.s32.totalorder %s16, 0
    %p79 = por %p77, %p78
    %p80 = scmp.ne.s32.totalorder %s68, %s69
    %p81 = scmp.eq.s32.totalorder %s17, 1
    %p82 = por %p80, %p81
    %p84 = scmp.ne.s32.totalorder %s69, %s83
    %p85 = scmp.eq.s32.totalorder %s17, 0
    %p86 = por %p84, %p85
    %s88 = sadd.s32 %s87, 1
    %p91 = scmp.eq.s32.totalorder %s11, 1
    %p92 = scmp.ne.s32.totalorder %s87, %s89
    %p93 = scmp.eq.s32.totalorder %s11, 0
    %p94 = por %p92, %p93
    %p95 = scmp.ne.s32.totalorder %s87, %s89
    %p96 = scmp.eq.s32.totalorder %s16, 1
    %p97 = por %p95, %p96
    %p98 = scmp.ne.s32.totalorder %s89, %s90
    %p99 = scmp.eq.s32.totalorder %s16, 0
    %p100 = por %p98, %p99
    %p101 = scmp.ne.s32.totalorder %s89, %s90
    %p102 = scmp.eq.s32.totalorder %s17, 1
    %p103 = por %p101, %p102
    %p105 = scmp.ne.s32.totalorder %s90, %s104
    %p106 = scmp.eq.s32.totalorder %s17, 0
    %p107 = por %p105, %p106
    %s109 = sadd.s32 %s108, 1
    %p112 = scmp.eq.s32.totalorder %s11, 1
    %p113 = scmp.ne.s32.totalorder %s108, %s110
    %p114 = scmp.eq.s32.totalorder %s11, 0
    %p115 = por %p113, %p114
    %p116 = scmp.ne.s32.totalorder %s108, %s110
    %p117 = scmp.eq.s32.totalorder %s16, 1
    %p118 = por %p116, %p117
    %p119 = scmp.ne.s32.totalorder %s110, %s111
    %p120 = scmp.eq.s32.totalorder %s16, 0
    %p121 = por %p119, %p120
    %p122 = scmp.ne.s32.totalorder %s110, %s111
    %p123 = scmp.eq.s32.totalorder %s17, 1
    %p124 = por %p122, %p123
    %p126 = scmp.ne.s32.totalorder %s111, %s125
    %p127 = scmp.eq.s32.totalorder %s17, 0
    %p128 = por %p126, %p127
    %s129 = ssub.s32 %s11, %s18
    %p130 = scmp.eq.s32.totalorder %s129, 0
    %s132 = sadd.s32 %s131, 1
    %s133 = scalar_select %p130, %s131, %s132
    %p136 = pneg %p130
    %p137 = scmp.eq.s32.totalorder %s11, 1
    %p138 = por %p136, %p137
    %p139 = scmp.ne.s32.totalorder %s131, %s134
    %p140 = scmp.eq.s32.totalorder %s11, 0
    %p141 = por %p139, %p140
    %p142 = scmp.ne.s32.totalorder %s131, %s134
    %p143 = scmp.eq.s32.totalorder %s16, 1
    %p144 = por %p142, %p143
    %p145 = scmp.ne.s32.totalorder %s134, %s135
    %p146 = scmp.eq.s32.totalorder %s16, 0
    %p147 = por %p145, %p146
    %p148 = scmp.ne.s32.totalorder %s134, %s135
    %p149 = scmp.eq.s32.totalorder %s17, 1
    %p150 = por %p148, %p149
    %p152 = scmp.ne.s32.totalorder %s135, %s151
    %p153 = scmp.eq.s32.totalorder %s17, 0
    %p154 = por %p152, %p153
    %p155 = scmp.le.s32.totalorder 1, %s11
    %p156 = scmp.lt.s32.totalorder %s11, 3
    %p157 = pnand %p155, %p156
    %p158 = pneg %p157
    // Predicated region
    $region9: #{conv_block_base.1} parent=5 // pred_check
      _
    $region10: #{conv_block_base.1} parent=5 // pred_check_branch
      %160 = sbr.rel (%p157) target = $region12
    $region11: #{conv_block_base.1} parent=5 // pred_region
      %s161 = ssub.s32 %s11, 1
      // Predicated region
      $region13: #{conv_block_base.1} parent=11 // pred_check
        %p162 = pneg %p58
      $region14: #{conv_block_base.1} parent=11 // pred_check_branch
        %164 = sbr.rel (%p162) target = $region16
      $region15: #{conv_block_base.1} parent=11 // pred_region
        _
      $region16: #{conv_block_base.1} parent=11 // pred_fallthru
        _
      // Predicated region
      $region17: #{conv_block_base.1} parent=11 // pred_check
        %p165 = pneg %p79
      $region18: #{conv_block_base.1} parent=11 // pred_check_branch
        %167 = sbr.rel (%p165) target = $region20
      $region19: #{conv_block_base.1} parent=11 // pred_region
        _
      $region20: #{conv_block_base.1} parent=11 // pred_fallthru
        _
      // Predicated region
      $region21: #{conv_block_base.1} parent=11 // pred_check
        %p168 = pneg %p100
      $region22: #{conv_block_base.1} parent=11 // pred_check_branch
        %170 = sbr.rel (%p168) target = $region24
      $region23: #{conv_block_base.1} parent=11 // pred_region
        _
      $region24: #{conv_block_base.1} parent=11 // pred_fallthru
        _
      // Predicated region
      $region25: #{conv_block_base.1} parent=11 // pred_check
        %p171 = pneg %p121
      $region26: #{conv_block_base.1} parent=11 // pred_check_branch
        %173 = sbr.rel (%p171) target = $region28
      $region27: #{conv_block_base.1} parent=11 // pred_region
        _
      $region28: #{conv_block_base.1} parent=11 // pred_fallthru
        _
    $region12: #{conv_block_base.1} parent=5 // pred_fallthru
      _
    %p174 = scmp.lt.s32.totalorder %s11, 2
    // Predicated region
    $region29: #{conv_block_base.1} parent=5 // pred_check
      %p175 = pneg %p174
    $region30: #{conv_block_base.1} parent=5 // pred_check_branch
      %177 = sbr.rel (%p175) target = $region32
    $region31: #{conv_block_base.1} parent=5 // pred_region
      // Predicated region
      $region33: #{conv_block_base.1} parent=31 // pred_check
        %p178 = pneg %p31
      $region34: #{conv_block_base.1} parent=31 // pred_check_branch
        %180 = sbr.rel (%p178) target = $region36
      $region35: #{conv_block_base.1} parent=31 // pred_region
        %p181 = scmp.lt.s32.totalorder %s11, 1
        %s182 = scalar_select %p181, %s11, 1
        %s183 = smul.addr %s182, 2
        %s184 = smul.addr %s183, 4
        %s185 = scalar_lea.vmem %s0, %s184
      $region36: #{conv_block_base.1} parent=31 // pred_fallthru
        _
    $region32: #{conv_block_base.1} parent=5 // pred_fallthru
      _
    %p186 = scmp.le.s32.totalorder 1, %s11
    %p187 = scmp.lt.s32.totalorder %s11, 3
    %p188 = pnand %p186, %p187
    %p189 = pneg %p188
    // Predicated region
    $region37: #{conv_block_base.1} parent=5 // pred_check
      _
    $region38: #{conv_block_base.1} parent=5 // pred_check_branch
      %191 = sbr.rel (%p188) target = $region40
    $region39: #{conv_block_base.1} parent=5 // pred_region
      %s192 = ssub.s32 %s11, 1
      %p193 = scmp.lt.s32.totalorder %s16, 1
      %s194 = scalar_select %p193, %s16, 1
      %s195 = smul.addr %s194, 2
      %s196 = smul.addr %s195, 4
      %s197 = scalar_lea.vmem %s0, %s196
      %p198 = pneg %p37
      %p199 = pneg %p34
      %p200 = pneg %p58
      %p201 = pneg %p55
      %p202 = pneg %p79
      %p203 = pneg %p76
      %p204 = pneg %p100
      %p205 = pneg %p97
      %p206 = pneg %p121
      %p207 = pneg %p118
      %p208 = pneg %p147
      %p209 = pneg %p144
      %p210 = scmp.lt.s32.totalorder %s16, 1
      %s211 = scalar_select %p210, %s16, 1
      %s212 = smul.addr %s211, 8
      %s213 = scalar_lea.vmem %s5, %s212
      %p214 = scmp.lt.s32.totalorder %s16, 1
      %s215 = scalar_select %p214, %s16, 1
      %s216 = smul.addr %s215, 2
      %s217 = smul.addr %s216, 4
      %s218 = scalar_lea.vmem %s0, %s217
      %p219 = scmp.lt.s32.totalorder %s16, 1
      %s220 = scalar_select %p219, %s16, 1
      %s221 = smul.addr %s220, 8
      %s222 = scalar_lea.vmem %s5, %s221
      %v223 = vlaneseq
      %v224 = vand.u32 %v223, 127
      %v225 = vadd.s32 %v224, 128
      %vm226 = vcmp.lt.s32.totalorder %v224, 0
      %v227 = vsub.s32 0, %v224
      %v228 = vsel %vm226, %v227, %v224
      %v229 = vshrl.u32 %v228, 4
      %v230 = vand.u32 %v228, 15
      %v231 = vsub.s32 0, %v230
      %v232 = vsel %vm226, %v231, %v230
      %vm233 = vcmp.lt.s32.totalorder %v225, 0
      %v234 = vsub.s32 0, %v225
      %v235 = vsel %vm233, %v234, %v225
      %v236 = vshrl.u32 %v235, 4
      %v237 = vand.u32 %v235, 15
      %v238 = vsub.s32 0, %v237
      %v239 = vsel %vm233, %v238, %v237
      %vm240 = vcmp.ne.s32.totalorder %v232, 0
      %vm241 = vcmp.ne.s32.totalorder %v239, 0
      %vm242 = vcmp.lt.s32.totalorder %v232, 0
      %vm243 = vcmp.lt.s32.totalorder %v239, 0
      %vm244 = vmand %vm242, %vm240
      %vm245 = vmand %vm243, %vm241
      %v246 = vadd.s32 %v232, 16
      %v247 = vadd.s32 %v239, 16
      %v248 = vsel %vm244, %v246, %v232
      %v249 = vsel %vm245, %v247, %v239
      %vm250 = vcmp.ne.s32.totalorder %v248, 0
      %vm251 = vcmp.ne.s32.totalorder %v249, 0
      %vm252 = vcmp.ne.s32.totalorder %v248, 15
      %vm253 = vcmp.ne.s32.totalorder %v249, 15
      %v254 = vlaneseq
      %v255 = vshrl.u32 %v254, 7
      %v256 = vadd.s32 %v255, 8
      %v257 = vmul.u32 %v224, 2
      %vm258 = vcmp.eq.s32.totalorder %v255, %v257
      %vm259 = vcmp.eq.s32.totalorder %v256, %v257
      %v260 = vsel %vm258, 1, 0
      %v261 = vsel %vm259, 1, 0
      %v262 = vcvt.s32.f32 %v260
      %v263 = vcvt.s32.f32 %v261
      %264 = vst [vmem:[#allocation2] sm:$0xff] 0.0
      %265 = vst [vmem:[#allocation2 + $0x8] sm:$0xff] 0.0
      %vm266 = vcmask 277504
      %267 = vst.msk [vmem:[#allocation2 + $0x10] sm:$0xff] %vm266, 0.0
      %v268 = vld [vmem:[%s218] sm:$0xff]
      %v270 = vcombine.high %v268, %v268
      %271 = vrot.lane.b32.xlu0 %v268, 17
      %v272 = vpop.permute.xlu0 %271
      %273 = vrot.lane.b32.xlu0 %v270, 17
      %v274 = vpop.permute.xlu0 %273
      %vm275 = vcmask 138240
      %v276 = vsel %vm275, %v272, %v274
      %vm280 = vcmask 1043592
      %281 = vst.msk [vmem:[#allocation2] sm:$0xf] %vm280, %v272
      %282 = vst [vmem:[#allocation2 + $0x8] sm:$0xf] %v276
      %vm283 = vcmask 134144
      %284 = vst.msk [vmem:[#allocation2 + $0x10] sm:$0xf] %vm283, %v274
      %v285 = vld [vmem:[#allocation2] sm:$0xff]
      %v286 = vld [vmem:[#allocation2 + $0x8] sm:$0xff]
      %v287 = vsel %vm250, 1, 0
      %v288 = vsel %vm251, 1, 0
      %vm289 = vcmp.eq.s32.totalorder %v287, 1
      %vm290 = vcmp.eq.s32.totalorder %v288, 1
      %v291 = vsel %vm289, %v285, 0.0
      %v292 = vsel %vm290, %v286, 0.0
      %293 = vst [vmem:[#allocation3] sm:$0xff] %v291
      %294 = vst [vmem:[#allocation3 + $0x8] sm:$0xff] %v292
      %v295 = vld [vmem:[#allocation2] sm:$0xff]
      %v296 = vld [vmem:[#allocation2 + $0x8] sm:$0xff]
      %v297 = vld [vmem:[#allocation2 + $0x10] sm:$0xff]
      %301 = vrot.lane.b32.xlu0 %v295, 127
      %v302 = vpop.permute.xlu0 %301
      %303 = vrot.lane.b32.xlu0 %v296, 127
      %v304 = vpop.permute.xlu0 %303
      %305 = vrot.lane.b32.xlu0 %v297, 127
      %v306 = vpop.permute.xlu0 %305
      %vm307 = vcmask 1039360
      %v308 = vsel %vm307, %v302, %v304
      %v309 = vsel %vm307, %v304, %v306
      %312 = vst [vmem:[#allocation3 + $0x10] sm:$0xff] %v308
      %313 = vst [vmem:[#allocation3 + $0x18] sm:$0xff] %v309
      %v314 = vld [vmem:[#allocation2] sm:$0xff]
      %v315 = vld [vmem:[#allocation2 + $0x8] sm:$0xff]
      %v316 = vld [vmem:[#allocation2 + $0x10] sm:$0xff]
      %v317 = vsel %vm252, 1, 0
      %v318 = vsel %vm253, 1, 0
      %vm319 = vcmp.eq.s32.totalorder %v317, 1
      %vm320 = vcmp.eq.s32.totalorder %v318, 1
      %324 = vrot.lane.b32.xlu0 %v314, 126
      %v325 = vpop.permute.xlu0 %324
      %326 = vrot.lane.b32.xlu0 %v315, 126
      %v327 = vpop.permute.xlu0 %326
      %328 = vrot.lane.b32.xlu0 %v316, 126
      %v329 = vpop.permute.xlu0 %328
      %vm330 = vcmask 1031168
      %v331 = vsel %vm330, %v325, %v327
      %v332 = vsel %vm330, %v327, %v329
      %v335 = vsel %vm319, %v331, 0.0
      %v336 = vsel %vm320, %v332, 0.0
      %337 = vst [vmem:[#allocation3 + $0x20] sm:$0xff] %v335
      %338 = vst [vmem:[#allocation3 + $0x28] sm:$0xff] %v336
      %v339 = vld [vmem:[#allocation2] sm:$0xff]
      %v340 = vld [vmem:[#allocation2 + $0x8] sm:$0xff]
      %v341 = vld [vmem:[#allocation2 + $0x10] sm:$0xff]
      %345 = vrot.lane.b32.xlu0 %v339, 112
      %v346 = vpop.permute.xlu0 %345
      %347 = vrot.lane.b32.xlu0 %v340, 112
      %v348 = vpop.permute.xlu0 %347
      %349 = vrot.lane.b32.xlu0 %v341, 112
      %v350 = vpop.permute.xlu0 %349
      %vm351 = vcmask 916480
      %v352 = vsel %vm351, %v346, %v348
      %v353 = vsel %vm351, %v348, %v350
      %v356 = vsel %vm289, %v352, 0.0
      %v357 = vsel %vm290, %v353, 0.0
      %358 = vst [vmem:[#allocation3 + $0x30] sm:$0xff] %v356
      %359 = vst [vmem:[#allocation3 + $0x38] sm:$0xff] %v357
      %v360 = vld [vmem:[#allocation2] sm:$0xff]
      %v361 = vld [vmem:[#allocation2 + $0x8] sm:$0xff]
      %v362 = vld [vmem:[#allocation2 + $0x10] sm:$0xff]
      %366 = vrot.lane.b32.xlu0 %v360, 111
      %v367 = vpop.permute.xlu0 %366
      %368 = vrot.lane.b32.xlu0 %v361, 111
      %v369 = vpop.permute.xlu0 %368
      %370 = vrot.lane.b32.xlu0 %v362, 111
      %v371 = vpop.permute.xlu0 %370
      %vm372 = vcmask 908288
      %v373 = vsel %vm372, %v367, %v369
      %v374 = vsel %vm372, %v369, %v371
      %377 = vst [vmem:[#allocation3 + $0x40] sm:$0xff] %v373
      %378 = vst [vmem:[#allocation3 + $0x48] sm:$0xff] %v374
      %v379 = vld [vmem:[#allocation2] sm:$0xff]
      %v380 = vld [vmem:[#allocation2 + $0x8] sm:$0xff]
      %v381 = vld [vmem:[#allocation2 + $0x10] sm:$0xff]
      %385 = vrot.lane.b32.xlu0 %v379, 110
      %v386 = vpop.permute.xlu0 %385
      %387 = vrot.lane.b32.xlu0 %v380, 110
      %v388 = vpop.permute.xlu0 %387
      %389 = vrot.lane.b32.xlu0 %v381, 110
      %v390 = vpop.permute.xlu0 %389
      %vm391 = vcmask 900096
      %v392 = vsel %vm391, %v386, %v388
      %v393 = vsel %vm391, %v388, %v390
      %v396 = vsel %vm319, %v392, 0.0
      %v397 = vsel %vm320, %v393, 0.0
      %398 = vst [vmem:[#allocation3 + $0x50] sm:$0xff] %v396
      %399 = vst [vmem:[#allocation3 + $0x58] sm:$0xff] %v397
      %v400 = vld [vmem:[#allocation2] sm:$0xff]
      %v401 = vld [vmem:[#allocation2 + $0x8] sm:$0xff]
      %v402 = vld [vmem:[#allocation2 + $0x10] sm:$0xff]
      %406 = vrot.lane.b32.xlu0 %v400, 96
      %v407 = vpop.permute.xlu0 %406
      %408 = vrot.lane.b32.xlu0 %v401, 96
      %v409 = vpop.permute.xlu0 %408
      %410 = vrot.lane.b32.xlu0 %v402, 96
      %v411 = vpop.permute.xlu0 %410
      %vm412 = vcmask 785408
      %v413 = vsel %vm412, %v407, %v409
      %v414 = vsel %vm412, %v409, %v411
      %v417 = vsel %vm289, %v413, 0.0
      %v418 = vsel %vm290, %v414, 0.0
      %419 = vst [vmem:[#allocation3 + $0x60] sm:$0xff] %v417
      %420 = vst [vmem:[#allocation3 + $0x68] sm:$0xff] %v418
      %v421 = vld [vmem:[#allocation2] sm:$0xff]
      %v422 = vld [vmem:[#allocation2 + $0x8] sm:$0xff]
      %v423 = vld [vmem:[#allocation2 + $0x10] sm:$0xff]
      %427 = vrot.lane.b32.xlu0 %v421, 95
      %v428 = vpop.permute.xlu0 %427
      %429 = vrot.lane.b32.xlu0 %v422, 95
      %v430 = vpop.permute.xlu0 %429
      %431 = vrot.lane.b32.xlu0 %v423, 95
      %v432 = vpop.permute.xlu0 %431
      %vm433 = vcmask 777216
      %v434 = vsel %vm433, %v428, %v430
      %v435 = vsel %vm433, %v430, %v432
      %438 = vst [vmem:[#allocation3 + $0x70] sm:$0xff] %v434
      %439 = vst [vmem:[#allocation3 + $0x78] sm:$0xff] %v435
      %v440 = vld [vmem:[#allocation2] sm:$0xff]
      %v441 = vld [vmem:[#allocation2 + $0x8] sm:$0xff]
      %v442 = vld [vmem:[#allocation2 + $0x10] sm:$0xff]
      %446 = vrot.lane.b32.xlu0 %v440, 94
      %v447 = vpop.permute.xlu0 %446
      %448 = vrot.lane.b32.xlu0 %v441, 94
      %v449 = vpop.permute.xlu0 %448
      %450 = vrot.lane.b32.xlu0 %v442, 94
      %v451 = vpop.permute.xlu0 %450
      %vm452 = vcmask 769024
      %v453 = vsel %vm452, %v447, %v449
      %v454 = vsel %vm452, %v449, %v451
      %v457 = vsel %vm319, %v453, 0.0
      %v458 = vsel %vm320, %v454, 0.0
      %459 = vst [vmem:[#allocation3 + $0x80] sm:$0xff] %v457
      %460 = vst [vmem:[#allocation3 + $0x88] sm:$0xff] %v458
      %v461 = vld [vmem:[%s1] sm:$0xff]
      %v462 = vld [vmem:[#allocation3] sm:$0xff]
      %v463 = vld [vmem:[#allocation3 + $0x8] sm:$0xff]
      %v464 = vld [vmem:[#allocation3 + $0x10] sm:$0xff]
      %v465 = vld [vmem:[#allocation3 + $0x18] sm:$0xff]
      %v466 = vld [vmem:[#allocation3 + $0x20] sm:$0xff]
      %v467 = vld [vmem:[#allocation3 + $0x28] sm:$0xff]
      %v468 = vld [vmem:[#allocation3 + $0x30] sm:$0xff]
      %v469 = vld [vmem:[#allocation3 + $0x38] sm:$0xff]
      %v470 = vld [vmem:[#allocation3 + $0x40] sm:$0xff]
      %v471 = vld [vmem:[#allocation3 + $0x48] sm:$0xff]
      %v472 = vld [vmem:[#allocation3 + $0x50] sm:$0xff]
      %v473 = vld [vmem:[#allocation3 + $0x58] sm:$0xff]
      %v474 = vld [vmem:[#allocation3 + $0x60] sm:$0xff]
      %v475 = vld [vmem:[#allocation3 + $0x68] sm:$0xff]
      %v476 = vld [vmem:[#allocation3 + $0x70] sm:$0xff]
      %v477 = vld [vmem:[#allocation3 + $0x78] sm:$0xff]
      %v478 = vld [vmem:[#allocation3 + $0x80] sm:$0xff]
      %v479 = vld [vmem:[#allocation3 + $0x88] sm:$0xff]
      %v480 = vld [vmem:[%s2] sm:$0xff]
      %482 = vset.pattern.permute.xlu0 0
      %483 = vperm.xlu0 %482, %v480
      %v484 = vpop.permute.xlu0 %483
      %vm486 = vcmask 588800
      %v488 = vsel %vm486, %v461, 0
      %490 = vmatprep.subr.mxu0 0.0
      %491 = vmatpush1.msra.mxu0 0.0
      %492 = vmatprep.subr.mxu0 0.0
      %493 = vmatpush1.msra.mxu0 0.0
      %494 = vmatprep.subr.mxu0 0.0
      %495 = vmatpush1.msra.mxu0 0.0
      %496 = vmatprep.subr.mxu0 0.0
      %497 = vmatpush1.msra.mxu0 0.0
      %498 = vmatprep.subr.mxu0 0.0
      %499 = vmatpush1.msra.mxu0 0.0
      %500 = vmatprep.subr.mxu0 0.0
      %501 = vmatpush1.msra.mxu0 0.0
      %502 = vmatprep.subr.mxu0 0.0
      %503 = vmatpush1.msra.mxu0 0.0
      %504 = vmatprep.subr.mxu0 %v479
      %505 = vmatpush1.msra.mxu0 %v478
      %506 = vmatprep.subr.mxu0 %v477
      %507 = vmatpush1.msra.mxu0 %v476
      %508 = vmatprep.subr.mxu0 %v475
      %509 = vmatpush1.msra.mxu0 %v474
      %510 = vmatprep.subr.mxu0 %v473
      %511 = vmatpush1.msra.mxu0 %v472
      %512 = vmatprep.subr.mxu0 %v471
      %513 = vmatpush1.msra.mxu0 %v470
      %514 = vmatprep.subr.mxu0 %v469
      %515 = vmatpush1.msra.mxu0 %v468
      %516 = vmatprep.subr.mxu0 %v467
      %517 = vmatpush1.msra.mxu0 %v466
      %518 = vmatprep.subr.mxu0 %v465
      %519 = vmatpush1.msra.mxu0 %v464
      %520 = vmatprep.subr.mxu0 %v463
      %521 = vmatpush1.msra.mxu0 %v462
      %522 = vmatprep.subr.mxu0 0.0
      %523 = vmatpush2.msra.mxu0 0.0
      %524 = vmatprep.subr.mxu0 0.0
      %525 = vmatpush2.msra.mxu0 0.0
      %526 = vmatprep.subr.mxu0 0.0
      %527 = vmatpush2.msra.mxu0 0.0
      %528 = vmatprep.subr.mxu0 0.0
      %529 = vmatpush2.msra.mxu0 0.0
      %530 = vmatprep.subr.mxu0 0.0
      %531 = vmatpush2.msra.mxu0 0.0
      %532 = vmatprep.subr.mxu0 0.0
      %533 = vmatpush2.msra.mxu0 0.0
      %534 = vmatprep.subr.mxu0 0.0
      %535 = vmatpush2.msra.mxu0 0.0
      %536 = vmatprep.subr.mxu0 0.0
      %537 = vmatpush2.msra.mxu0 0.0
      %538 = vmatprep.subr.mxu0 0.0
      %539 = vmatpush2.msra.mxu0 0.0
      %540 = vmatprep.subr.mxu0 0.0
      %541 = vmatpush2.msra.mxu0 0.0
      %542 = vmatprep.subr.mxu0 0.0
      %543 = vmatpush2.msra.mxu0 0.0
      %544 = vmatprep.subr.mxu0 0.0
      %545 = vmatpush2.msra.mxu0 0.0
      %546 = vmatprep.subr.mxu0 0.0
      %547 = vmatpush2.msra.mxu0 0.0
      %548 = vmatprep.subr.mxu0 0.0
      %549 = vmatpush2.msra.mxu0 0.0
      %550 = vmatprep.subr.mxu0 0.0
      %551 = vmatpush2.msra.mxu0 0.0
      %552 = vmatprep.subr.mxu0 0.0
      %553 = vmatpush2.msra.mxu0 0.0
      %554 = vmatprep.mubr.f32.mxu0 0.0
      %555 = vmatmul.mubr.f32.gmra.mxu0 %v488
      %v556 = vpop.f32.mrf.mxu0
      %v557 = vadd.f32 %v484, %v556
      %v558 = vpop.f32.mrf.mxu0
      %v559 = vadd.f32 %v484, %v558
      %560 = vdwg.mxu0
      %v561 = vmax.f32 %v557, 0.0
      %v562 = vmax.f32 %v559, 0.0
      %565 = vrot.lane.b32.xlu0 %v561, 17
      %v566 = vpop.permute.xlu0 %565
      %567 = vrot.lane.b32.xlu0 %v562, 17
      %v568 = vpop.permute.xlu0 %567
      %v569 = vsel %vm275, %v566, %v568
      %vm573 = vcmask 1047688
      %574 = vst.msk [vmem:[#allocation2] sm:$0xff] %vm573, %v566
      %575 = vst [vmem:[#allocation2 + $0x8] sm:$0xff] %v569
      %576 = vst.msk [vmem:[#allocation2 + $0x10] sm:$0xff] %vm275, %v568
      %v577 = vld [vmem:[#allocation2] sm:$0xff]
      %v578 = vld [vmem:[#allocation2 + $0x8] sm:$0xff]
      %v579 = vsel %vm289, %v577, 0.0
      %v580 = vsel %vm290, %v578, 0.0
      %581 = vst [vmem:[#allocation3] sm:$0xff] %v579
      %582 = vst [vmem:[#allocation3 + $0x8] sm:$0xff] %v580
      %v583 = vld [vmem:[#allocation2] sm:$0xff]
      %v584 = vld [vmem:[#allocation2 + $0x8] sm:$0xff]
      %v585 = vld [vmem:[#allocation2 + $0x10] sm:$0xff]
      %589 = vrot.lane.b32.xlu0 %v583, 127
      %v590 = vpop.permute.xlu0 %589
      %591 = vrot.lane.b32.xlu0 %v584, 127
      %v592 = vpop.permute.xlu0 %591
      %593 = vrot.lane.b32.xlu0 %v585, 127
      %v594 = vpop.permute.xlu0 %593
      %v595 = vsel %vm307, %v590, %v592
      %v596 = vsel %vm307, %v592, %v594
      %599 = vst [vmem:[#allocation3 + $0x10] sm:$0xff] %v595
      %600 = vst [vmem:[#allocation3 + $0x18] sm:$0xff] %v596
      %v601 = vld [vmem:[#allocation2] sm:$0xff]
      %v602 = vld [vmem:[#allocation2 + $0x8] sm:$0xff]
      %v603 = vld [vmem:[#allocation2 + $0x10] sm:$0xff]
      %607 = vrot.lane.b32.xlu0 %v601, 126
      %v608 = vpop.permute.xlu0 %607
      %609 = vrot.lane.b32.xlu0 %v602, 126
      %v610 = vpop.permute.xlu0 %609
      %611 = vrot.lane.b32.xlu0 %v603, 126
      %v612 = vpop.permute.xlu0 %611
      %v613 = vsel %vm330, %v608, %v610
      %v614 = vsel %vm330, %v610, %v612
      %v617 = vsel %vm319, %v613, 0.0
      %v618 = vsel %vm320, %v614, 0.0
      %619 = vst [vmem:[#allocation3 + $0x20] sm:$0xff] %v617
      %620 = vst [vmem:[#allocation3 + $0x28] sm:$0xff] %v618
      %v621 = vld [vmem:[#allocation2] sm:$0xff]
      %v622 = vld [vmem:[#allocation2 + $0x8] sm:$0xff]
      %v623 = vld [vmem:[#allocation2 + $0x10] sm:$0xff]
      %627 = vrot.lane.b32.xlu0 %v621, 112
      %v628 = vpop.permute.xlu0 %627
      %629 = vrot.lane.b32.xlu0 %v622, 112
      %v630 = vpop.permute.xlu0 %629
      %631 = vrot.lane.b32.xlu0 %v623, 112
      %v632 = vpop.permute.xlu0 %631
      %v633 = vsel %vm351, %v628, %v630
      %v634 = vsel %vm351, %v630, %v632
      %v637 = vsel %vm289, %v633, 0.0
      %v638 = vsel %vm290, %v634, 0.0
      %639 = vst [vmem:[#allocation3 + $0x30] sm:$0xff] %v637
      %640 = vst [vmem:[#allocation3 + $0x38] sm:$0xff] %v638
      %v641 = vld [vmem:[#allocation2] sm:$0xff]
      %v642 = vld [vmem:[#allocation2 + $0x8] sm:$0xff]
      %v643 = vld [vmem:[#allocation2 + $0x10] sm:$0xff]
      %647 = vrot.lane.b32.xlu0 %v641, 111
      %v648 = vpop.permute.xlu0 %647
      %649 = vrot.lane.b32.xlu0 %v642, 111
      %v650 = vpop.permute.xlu0 %649
      %651 = vrot.lane.b32.xlu0 %v643, 111
      %v652 = vpop.permute.xlu0 %651
      %v653 = vsel %vm372, %v648, %v650
      %v654 = vsel %vm372, %v650, %v652
      %657 = vst [vmem:[#allocation3 + $0x40] sm:$0xff] %v653
      %658 = vst [vmem:[#allocation3 + $0x48] sm:$0xff] %v654
      %v659 = vld [vmem:[#allocation2] sm:$0xff]
      %v660 = vld [vmem:[#allocation2 + $0x8] sm:$0xff]
      %v661 = vld [vmem:[#allocation2 + $0x10] sm:$0xff]
      %665 = vrot.lane.b32.xlu0 %v659, 110
      %v666 = vpop.permute.xlu0 %665
      %667 = vrot.lane.b32.xlu0 %v660, 110
      %v668 = vpop.permute.xlu0 %667
      %669 = vrot.lane.b32.xlu0 %v661, 110
      %v670 = vpop.permute.xlu0 %669
      %v671 = vsel %vm391, %v666, %v668
      %v672 = vsel %vm391, %v668, %v670
      %v675 = vsel %vm319, %v671, 0.0
      %v676 = vsel %vm320, %v672, 0.0
      %677 = vst [vmem:[#allocation3 + $0x50] sm:$0xff] %v675
      %678 = vst [vmem:[#allocation3 + $0x58] sm:$0xff] %v676
      %v679 = vld [vmem:[#allocation2] sm:$0xff]
      %v680 = vld [vmem:[#allocation2 + $0x8] sm:$0xff]
      %v681 = vld [vmem:[#allocation2 + $0x10] sm:$0xff]
      %685 = vrot.lane.b32.xlu0 %v679, 96
      %v686 = vpop.permute.xlu0 %685
      %687 = vrot.lane.b32.xlu0 %v680, 96
      %v688 = vpop.permute.xlu0 %687
      %689 = vrot.lane.b32.xlu0 %v681, 96
      %v690 = vpop.permute.xlu0 %689
      %v691 = vsel %vm412, %v686, %v688
      %v692 = vsel %vm412, %v688, %v690
      %v695 = vsel %vm289, %v691, 0.0
      %v696 = vsel %vm290, %v692, 0.0
      %697 = vst [vmem:[#allocation3 + $0x60] sm:$0xff] %v695
      %698 = vst [vmem:[#allocation3 + $0x68] sm:$0xff] %v696
      %v699 = vld [vmem:[#allocation2] sm:$0xff]
      %v700 = vld [vmem:[#allocation2 + $0x8] sm:$0xff]
      %v701 = vld [vmem:[#allocation2 + $0x10] sm:$0xff]
      %705 = vrot.lane.b32.xlu0 %v699, 95
      %v706 = vpop.permute.xlu0 %705
      %707 = vrot.lane.b32.xlu0 %v700, 95
      %v708 = vpop.permute.xlu0 %707
      %709 = vrot.lane.b32.xlu0 %v701, 95
      %v710 = vpop.permute.xlu0 %709
      %v711 = vsel %vm433, %v706, %v708
      %v712 = vsel %vm433, %v708, %v710
      %715 = vst [vmem:[#allocation3 + $0x70] sm:$0xff] %v711
      %716 = vst [vmem:[#allocation3 + $0x78] sm:$0xff] %v712
      %v717 = vld [vmem:[#allocation2] sm:$0xff]
      %v718 = vld [vmem:[#allocation2 + $0x8] sm:$0xff]
      %v719 = vld [vmem:[#allocation2 + $0x10] sm:$0xff]
      %723 = vrot.lane.b32.xlu0 %v717, 94
      %v724 = vpop.permute.xlu0 %723
      %725 = vrot.lane.b32.xlu0 %v718, 94
      %v726 = vpop.permute.xlu0 %725
      %727 = vrot.lane.b32.xlu0 %v719, 94
      %v728 = vpop.permute.xlu0 %727
      %v729 = vsel %vm452, %v724, %v726
      %v730 = vsel %vm452, %v726, %v728
      %v733 = vsel %vm319, %v729, 0.0
      %v734 = vsel %vm320, %v730, 0.0
      %735 = vst [vmem:[#allocation3 + $0x80] sm:$0xff] %v733
      %736 = vst [vmem:[#allocation3 + $0x88] sm:$0xff] %v734
      %v737 = vld [vmem:[%s3] sm:$0xff]
      %v738 = vld [vmem:[#allocation3] sm:$0xff]
      %v739 = vld [vmem:[#allocation3 + $0x8] sm:$0xff]
      %v740 = vld [vmem:[#allocation3 + $0x10] sm:$0xff]
      %v741 = vld [vmem:[#allocation3 + $0x18] sm:$0xff]
      %v742 = vld [vmem:[#allocation3 + $0x20] sm:$0xff]
      %v743 = vld [vmem:[#allocation3 + $0x28] sm:$0xff]
      %v744 = vld [vmem:[#allocation3 + $0x30] sm:$0xff]
      %v745 = vld [vmem:[#allocation3 + $0x38] sm:$0xff]
      %v746 = vld [vmem:[#allocation3 + $0x40] sm:$0xff]
      %v747 = vld [vmem:[#allocation3 + $0x48] sm:$0xff]
      %v748 = vld [vmem:[#allocation3 + $0x50] sm:$0xff]
      %v749 = vld [vmem:[#allocation3 + $0x58] sm:$0xff]
      %v750 = vld [vmem:[#allocation3 + $0x60] sm:$0xff]
      %v751 = vld [vmem:[#allocation3 + $0x68] sm:$0xff]
      %v752 = vld [vmem:[#allocation3 + $0x70] sm:$0xff]
      %v753 = vld [vmem:[#allocation3 + $0x78] sm:$0xff]
      %v754 = vld [vmem:[#allocation3 + $0x80] sm:$0xff]
      %v755 = vld [vmem:[#allocation3 + $0x88] sm:$0xff]
      %v756 = vld [vmem:[%s4] sm:$0xff]
      %758 = vset.pattern.permute.xlu0 0
      %759 = vperm.xlu0 %758, %v756
      %v760 = vpop.permute.xlu0 %759
      %v763 = vsel %vm486, %v737, 0
      %765 = vmatprep.subr.mxu0 0.0
      %766 = vmatpush1.msra.mxu0 0.0
      %767 = vmatprep.subr.mxu0 0.0
      %768 = vmatpush1.msra.mxu0 0.0
      %769 = vmatprep.subr.mxu0 0.0
      %770 = vmatpush1.msra.mxu0 0.0
      %771 = vmatprep.subr.mxu0 0.0
      %772 = vmatpush1.msra.mxu0 0.0
      %773 = vmatprep.subr.mxu0 0.0
      %774 = vmatpush1.msra.mxu0 0.0
      %775 = vmatprep.subr.mxu0 0.0
      %776 = vmatpush1.msra.mxu0 0.0
      %777 = vmatprep.subr.mxu0 0.0
      %778 = vmatpush1.msra.mxu0 0.0
      %779 = vmatprep.subr.mxu0 %v755
      %780 = vmatpush1.msra.mxu0 %v754
      %781 = vmatprep.subr.mxu0 %v753
      %782 = vmatpush1.msra.mxu0 %v752
      %783 = vmatprep.subr.mxu0 %v751
      %784 = vmatpush1.msra.mxu0 %v750
      %785 = vmatprep.subr.mxu0 %v749
      %786 = vmatpush1.msra.mxu0 %v748
      %787 = vmatprep.subr.mxu0 %v747
      %788 = vmatpush1.msra.mxu0 %v746
      %789 = vmatprep.subr.mxu0 %v745
      %790 = vmatpush1.msra.mxu0 %v744
      %791 = vmatprep.subr.mxu0 %v743
      %792 = vmatpush1.msra.mxu0 %v742
      %793 = vmatprep.subr.mxu0 %v741
      %794 = vmatpush1.msra.mxu0 %v740
      %795 = vmatprep.subr.mxu0 %v739
      %796 = vmatpush1.msra.mxu0 %v738
      %797 = vmatprep.subr.mxu0 0.0
      %798 = vmatpush2.msra.mxu0 0.0
      %799 = vmatprep.subr.mxu0 0.0
      %800 = vmatpush2.msra.mxu0 0.0
      %801 = vmatprep.subr.mxu0 0.0
      %802 = vmatpush2.msra.mxu0 0.0
      %803 = vmatprep.subr.mxu0 0.0
      %804 = vmatpush2.msra.mxu0 0.0
      %805 = vmatprep.subr.mxu0 0.0
      %806 = vmatpush2.msra.mxu0 0.0
      %807 = vmatprep.subr.mxu0 0.0
      %808 = vmatpush2.msra.mxu0 0.0
      %809 = vmatprep.subr.mxu0 0.0
      %810 = vmatpush2.msra.mxu0 0.0
      %811 = vmatprep.subr.mxu0 0.0
      %812 = vmatpush2.msra.mxu0 0.0
      %813 = vmatprep.subr.mxu0 0.0
      %814 = vmatpush2.msra.mxu0 0.0
      %815 = vmatprep.subr.mxu0 0.0
      %816 = vmatpush2.msra.mxu0 0.0
      %817 = vmatprep.subr.mxu0 0.0
      %818 = vmatpush2.msra.mxu0 0.0
      %819 = vmatprep.subr.mxu0 0.0
      %820 = vmatpush2.msra.mxu0 0.0
      %821 = vmatprep.subr.mxu0 0.0
      %822 = vmatpush2.msra.mxu0 0.0
      %823 = vmatprep.subr.mxu0 0.0
      %824 = vmatpush2.msra.mxu0 0.0
      %825 = vmatprep.subr.mxu0 0.0
      %826 = vmatpush2.msra.mxu0 0.0
      %827 = vmatprep.subr.mxu0 0.0
      %828 = vmatpush2.msra.mxu0 0.0
      %829 = vmatprep.mubr.f32.mxu0 0.0
      %830 = vmatmul.mubr.f32.gmra.mxu0 %v763
      %v831 = vpop.f32.mrf.mxu0
      %v832 = vadd.f32 %v760, %v831
      %v833 = vpop.f32.mrf.mxu0
      %v834 = vadd.f32 %v760, %v833
      %835 = vdwg.mxu0
      %v836 = vmax.f32 %v832, 0.0
      %v837 = vmax.f32 %v834, 0.0
      %840 = vrot.lane.b32.xlu0 %v836, 17
      %v841 = vpop.permute.xlu0 %840
      %842 = vrot.lane.b32.xlu0 %v837, 17
      %v843 = vpop.permute.xlu0 %842
      %v844 = vsel %vm275, %v841, %v843
      %848 = vst.msk [vmem:[#allocation2] sm:$0xff] %vm573, %v841
      %849 = vst [vmem:[#allocation2 + $0x8] sm:$0xff] %v844
      %850 = vst.msk [vmem:[#allocation2 + $0x10] sm:$0xff] %vm275, %v843
      %v851 = vld [vmem:[#allocation2] sm:$0xff]
      %v852 = vld [vmem:[#allocation2 + $0x8] sm:$0xff]
      %v853 = vld [vmem:[#allocation2 + $0x10] sm:$0xff]
      %857 = vrot.lane.b32.xlu0 %v851, 127
      %v858 = vpop.permute.xlu0 %857
      %859 = vrot.lane.b32.xlu0 %v852, 127
      %v860 = vpop.permute.xlu0 %859
      %861 = vrot.lane.b32.xlu0 %v853, 127
      %v862 = vpop.permute.xlu0 %861
      %v863 = vsel %vm307, %v858, %v860
      %v864 = vsel %vm307, %v860, %v862
      %v868 = vmax.f32 %v851, %v863
      %v869 = vmax.f32 %v852, %v864
      %v870 = vmax.f32 %v853, %v862
      %874 = vrot.lane.b32.xlu0 %v868, 112
      %v875 = vpop.permute.xlu0 %874
      %876 = vrot.lane.b32.xlu0 %v869, 112
      %v877 = vpop.permute.xlu0 %876
      %878 = vrot.lane.b32.xlu0 %v870, 112
      %v879 = vpop.permute.xlu0 %878
      %v880 = vsel %vm351, %v875, %v877
      %v881 = vsel %vm351, %v877, %v879
      %v885 = vmax.f32 %v868, %v880
      %v886 = vmax.f32 %v869, %v881
      %v887 = vmax.f32 %v870, %v879
      %889 = vrot.lane.b32.xlu0 %v885, 111
      %v890 = vpop.permute.xlu0 %889
      %vm891 = vcmask 130048
      %v892 = vsel %vm891, %v890, 0
      %894 = vmatprep.subr.mxu0 0.0
      %895 = vmatpush1.msra.mxu0 0.0
      %896 = vmatprep.subr.mxu0 0.0
      %897 = vmatpush1.msra.mxu0 0.0
      %898 = vmatprep.subr.mxu0 0.0
      %899 = vmatpush1.msra.mxu0 0.0
      %900 = vmatprep.subr.mxu0 0.0
      %901 = vmatpush1.msra.mxu0 0.0
      %902 = vmatprep.subr.mxu0 0.0
      %903 = vmatpush1.msra.mxu0 0.0
      %904 = vmatprep.subr.mxu0 0.0
      %905 = vmatpush1.msra.mxu0 0.0
      %906 = vmatprep.subr.mxu0 0.0
      %907 = vmatpush1.msra.mxu0 0.0
      %908 = vmatprep.subr.mxu0 0.0
      %909 = vmatpush1.msra.mxu0 0.0
      %910 = vmatprep.subr.mxu0 0.0
      %911 = vmatpush1.msra.mxu0 0.0
      %912 = vmatprep.subr.mxu0 0.0
      %913 = vmatpush1.msra.mxu0 0.0
      %914 = vmatprep.subr.mxu0 0.0
      %915 = vmatpush1.msra.mxu0 0.0
      %916 = vmatprep.subr.mxu0 0.0
      %917 = vmatpush1.msra.mxu0 0.0
      %918 = vmatprep.subr.mxu0 0.0
      %919 = vmatpush1.msra.mxu0 0.0
      %920 = vmatprep.subr.mxu0 0.0
      %921 = vmatpush1.msra.mxu0 0.0
      %922 = vmatprep.subr.mxu0 0.0
      %923 = vmatpush1.msra.mxu0 %v263
      %924 = vmatprep.subr.mxu0 0.0
      %925 = vmatpush1.msra.mxu0 %v262
      %926 = vmatprep.subr.mxu0 0.0
      %927 = vmatpush2.msra.mxu0 0.0
      %928 = vmatprep.subr.mxu0 0.0
      %929 = vmatpush2.msra.mxu0 0.0
      %930 = vmatprep.subr.mxu0 0.0
      %931 = vmatpush2.msra.mxu0 0.0
      %932 = vmatprep.subr.mxu0 0.0
      %933 = vmatpush2.msra.mxu0 0.0
      %934 = vmatprep.subr.mxu0 0.0
      %935 = vmatpush2.msra.mxu0 0.0
      %936 = vmatprep.subr.mxu0 0.0
      %937 = vmatpush2.msra.mxu0 0.0
      %938 = vmatprep.subr.mxu0 0.0
      %939 = vmatpush2.msra.mxu0 0.0
      %940 = vmatprep.subr.mxu0 0.0
      %941 = vmatpush2.msra.mxu0 0.0
      %942 = vmatprep.subr.mxu0 0.0
      %943 = vmatpush2.msra.mxu0 0.0
      %944 = vmatprep.subr.mxu0 0.0
      %945 = vmatpush2.msra.mxu0 0.0
      %946 = vmatprep.subr.mxu0 0.0
      %947 = vmatpush2.msra.mxu0 0.0
      %948 = vmatprep.subr.mxu0 0.0
      %949 = vmatpush2.msra.mxu0 0.0
      %950 = vmatprep.subr.mxu0 0.0
      %951 = vmatpush2.msra.mxu0 0.0
      %952 = vmatprep.subr.mxu0 0.0
      %953 = vmatpush2.msra.mxu0 0.0
      %954 = vmatprep.subr.mxu0 0.0
      %955 = vmatpush2.msra.mxu0 0.0
      %956 = vmatprep.subr.mxu0 0.0
      %957 = vmatpush2.msra.mxu0 0.0
      %958 = vmatprep.mubr.f32.mxu0 0.0
      %959 = vmatmul.mubr.f32.gmra.mxu0 %v892
      %v960 = vpop.f32.mrf.mxu0
      %v961 = vadd.f32 0.0, %v960
      %v962 = vpop.f32.mrf.mxu0
      %963 = vdwg.mxu0
      %vm964 = vcmask 64512
      %965 = vst.msk [vmem:[%s222] sm:$0xff] %vm964, %v961
      %966 = vrot.lane.b32.xlu0 %v885, 79
      %v967 = vpop.permute.xlu0 %966
      %v968 = vsel %vm891, %v967, 0
      %970 = vmatprep.subr.mxu0 0.0
      %971 = vmatpush1.msra.mxu0 0.0
      %972 = vmatprep.subr.mxu0 0.0
      %973 = vmatpush1.msra.mxu0 0.0
      %974 = vmatprep.subr.mxu0 0.0
      %975 = vmatpush1.msra.mxu0 0.0
      %976 = vmatprep.subr.mxu0 0.0
      %977 = vmatpush1.msra.mxu0 0.0
      %978 = vmatprep.subr.mxu0 0.0
      %979 = vmatpush1.msra.mxu0 0.0
      %980 = vmatprep.subr.mxu0 0.0
      %981 = vmatpush1.msra.mxu0 0.0
      %982 = vmatprep.subr.mxu0 0.0
      %983 = vmatpush1.msra.mxu0 0.0
      %984 = vmatprep.subr.mxu0 0.0
      %985 = vmatpush1.msra.mxu0 0.0
      %986 = vmatprep.subr.mxu0 0.0
      %987 = vmatpush1.msra.mxu0 0.0
      %988 = vmatprep.subr.mxu0 0.0
      %989 = vmatpush1.msra.mxu0 0.0
      %990 = vmatprep.subr.mxu0 0.0
      %991 = vmatpush1.msra.mxu0 0.0
      %992 = vmatprep.subr.mxu0 0.0
      %993 = vmatpush1.msra.mxu0 0.0
      %994 = vmatprep.subr.mxu0 0.0
      %995 = vmatpush1.msra.mxu0 0.0
      %996 = vmatprep.subr.mxu0 0.0
      %997 = vmatpush1.msra.mxu0 0.0
      %998 = vmatprep.subr.mxu0 0.0
      %999 = vmatpush1.msra.mxu0 %v263
      %1000 = vmatprep.subr.mxu0 0.0
      %1001 = vmatpush1.msra.mxu0 %v262
      %1002 = vmatprep.subr.mxu0 0.0
      %1003 = vmatpush2.msra.mxu0 0.0
      %1004 = vmatprep.subr.mxu0 0.0
      %1005 = vmatpush2.msra.mxu0 0.0
      %1006 = vmatprep.subr.mxu0 0.0
      %1007 = vmatpush2.msra.mxu0 0.0
      %1008 = vmatprep.subr.mxu0 0.0
      %1009 = vmatpush2.msra.mxu0 0.0
      %1010 = vmatprep.subr.mxu0 0.0
      %1011 = vmatpush2.msra.mxu0 0.0
      %1012 = vmatprep.subr.mxu0 0.0
      %1013 = vmatpush2.msra.mxu0 0.0
      %1014 = vmatprep.subr.mxu0 0.0
      %1015 = vmatpush2.msra.mxu0 0.0
      %1016 = vmatprep.subr.mxu0 0.0
      %1017 = vmatpush2.msra.mxu0 0.0
      %1018 = vmatprep.subr.mxu0 0.0
      %1019 = vmatpush2.msra.mxu0 0.0
      %1020 = vmatprep.subr.mxu0 0.0
      %1021 = vmatpush2.msra.mxu0 0.0
      %1022 = vmatprep.subr.mxu0 0.0
      %1023 = vmatpush2.msra.mxu0 0.0
      %1024 = vmatprep.subr.mxu0 0.0
      %1025 = vmatpush2.msra.mxu0 0.0
      %1026 = vmatprep.subr.mxu0 0.0
      %1027 = vmatpush2.msra.mxu0 0.0
      %1028 = vmatprep.subr.mxu0 0.0
      %1029 = vmatpush2.msra.mxu0 0.0
      %1030 = vmatprep.subr.mxu0 0.0
      %1031 = vmatpush2.msra.mxu0 0.0
      %1032 = vmatprep.subr.mxu0 0.0
      %1033 = vmatpush2.msra.mxu0 0.0
      %1034 = vmatprep.mubr.f32.mxu0 0.0
      %1035 = vmatmul.mubr.f32.gmra.mxu0 %v968
      %v1036 = vpop.f32.mrf.mxu0
      %v1037 = vadd.f32 0.0, %v1036
      %v1038 = vpop.f32.mrf.mxu0
      %1039 = vdwg.mxu0
      %1041 = vrot.lane.b32.xlu0 %v1037, 8
      %v1042 = vpop.permute.xlu0 %1041
      %vm1044 = vcmask 130112
      %1045 = vst.msk [vmem:[%s222] sm:$0xff] %vm1044, %v1042
      %1046 = vrot.lane.b32.xlu0 %v885, 47
      %v1047 = vpop.permute.xlu0 %1046
      %v1048 = vsel %vm891, %v1047, 0
      %1050 = vmatprep.subr.mxu0 0.0
      %1051 = vmatpush1.msra.mxu0 0.0
      %1052 = vmatprep.subr.mxu0 0.0
      %1053 = vmatpush1.msra.mxu0 0.0
      %1054 = vmatprep.subr.mxu0 0.0
      %1055 = vmatpush1.msra.mxu0 0.0
      %1056 = vmatprep.subr.mxu0 0.0
      %1057 = vmatpush1.msra.mxu0 0.0
      %1058 = vmatprep.subr.mxu0 0.0
      %1059 = vmatpush1.msra.mxu0 0.0
      %1060 = vmatprep.subr.mxu0 0.0
      %1061 = vmatpush1.msra.mxu0 0.0
      %1062 = vmatprep.subr.mxu0 0.0
      %1063 = vmatpush1.msra.mxu0 0.0
      %1064 = vmatprep.subr.mxu0 0.0
      %1065 = vmatpush1.msra.mxu0 0.0
      %1066 = vmatprep.subr.mxu0 0.0
      %1067 = vmatpush1.msra.mxu0 0.0
      %1068 = vmatprep.subr.mxu0 0.0
      %1069 = vmatpush1.msra.mxu0 0.0
      %1070 = vmatprep.subr.mxu0 0.0
      %1071 = vmatpush1.msra.mxu0 0.0
      %1072 = vmatprep.subr.mxu0 0.0
      %1073 = vmatpush1.msra.mxu0 0.0
      %1074 = vmatprep.subr.mxu0 0.0
      %1075 = vmatpush1.msra.mxu0 0.0
      %1076 = vmatprep.subr.mxu0 0.0
      %1077 = vmatpush1.msra.mxu0 0.0
      %1078 = vmatprep.subr.mxu0 0.0
      %1079 = vmatpush1.msra.mxu0 %v263
      %1080 = vmatprep.subr.mxu0 0.0
      %1081 = vmatpush1.msra.mxu0 %v262
      %1082 = vmatprep.subr.mxu0 0.0
      %1083 = vmatpush2.msra.mxu0 0.0
      %1084 = vmatprep.subr.mxu0 0.0
      %1085 = vmatpush2.msra.mxu0 0.0
      %1086 = vmatprep.subr.mxu0 0.0
      %1087 = vmatpush2.msra.mxu0 0.0
      %1088 = vmatprep.subr.mxu0 0.0
      %1089 = vmatpush2.msra.mxu0 0.0
      %1090 = vmatprep.subr.mxu0 0.0
      %1091 = vmatpush2.msra.mxu0 0.0
      %1092 = vmatprep.subr.mxu0 0.0
      %1093 = vmatpush2.msra.mxu0 0.0
      %1094 = vmatprep.subr.mxu0 0.0
      %1095 = vmatpush2.msra.mxu0 0.0
      %1096 = vmatprep.subr.mxu0 0.0
      %1097 = vmatpush2.msra.mxu0 0.0
      %1098 = vmatprep.subr.mxu0 0.0
      %1099 = vmatpush2.msra.mxu0 0.0
      %1100 = vmatprep.subr.mxu0 0.0
      %1101 = vmatpush2.msra.mxu0 0.0
      %1102 = vmatprep.subr.mxu0 0.0
      %1103 = vmatpush2.msra.mxu0 0.0
      %1104 = vmatprep.subr.mxu0 0.0
      %1105 = vmatpush2.msra.mxu0 0.0
      %1106 = vmatprep.subr.mxu0 0.0
      %1107 = vmatpush2.msra.mxu0 0.0
      %1108 = vmatprep.subr.mxu0 0.0
      %1109 = vmatpush2.msra.mxu0 0.0
      %1110 = vmatprep.subr.mxu0 0.0
      %1111 = vmatpush2.msra.mxu0 0.0
      %1112 = vmatprep.subr.mxu0 0.0
      %1113 = vmatpush2.msra.mxu0 0.0
      %1114 = vmatprep.mubr.f32.mxu0 0.0
      %1115 = vmatmul.mubr.f32.gmra.mxu0 %v1048
      %v1116 = vpop.f32.mrf.mxu0
      %v1117 = vadd.f32 0.0, %v1116
      %v1118 = vpop.f32.mrf.mxu0
      %1119 = vdwg.mxu0
      %1121 = vrot.lane.b32.xlu0 %v1117, 16
      %v1122 = vpop.permute.xlu0 %1121
      %vm1124 = vcmask 195712
      %1125 = vst.msk [vmem:[%s222] sm:$0xff] %vm1124, %v1122
      %1127 = vrot.lane.b32.xlu0 %v885, 15
      %v1128 = vpop.permute.xlu0 %1127
      %1129 = vrot.lane.b32.xlu0 %v886, 15
      %v1130 = vpop.permute.xlu0 %1129
      %vm1131 = vcmask 121856
      %v1132 = vsel %vm1131, %v1128, %v1130
      %v1133 = vsel %vm891, %v1132, 0
      %1135 = vmatprep.subr.mxu0 0.0
      %1136 = vmatpush1.msra.mxu0 0.0
      %1137 = vmatprep.subr.mxu0 0.0
      %1138 = vmatpush1.msra.mxu0 0.0
      %1139 = vmatprep.subr.mxu0 0.0
      %1140 = vmatpush1.msra.mxu0 0.0
      %1141 = vmatprep.subr.mxu0 0.0
      %1142 = vmatpush1.msra.mxu0 0.0
      %1143 = vmatprep.subr.mxu0 0.0
      %1144 = vmatpush1.msra.mxu0 0.0
      %1145 = vmatprep.subr.mxu0 0.0
      %1146 = vmatpush1.msra.mxu0 0.0
      %1147 = vmatprep.subr.mxu0 0.0
      %1148 = vmatpush1.msra.mxu0 0.0
      %1149 = vmatprep.subr.mxu0 0.0
      %1150 = vmatpush1.msra.mxu0 0.0
      %1151 = vmatprep.subr.mxu0 0.0
      %1152 = vmatpush1.msra.mxu0 0.0
      %1153 = vmatprep.subr.mxu0 0.0
      %1154 = vmatpush1.msra.mxu0 0.0
      %1155 = vmatprep.subr.mxu0 0.0
      %1156 = vmatpush1.msra.mxu0 0.0
      %1157 = vmatprep.subr.mxu0 0.0
      %1158 = vmatpush1.msra.mxu0 0.0
      %1159 = vmatprep.subr.mxu0 0.0
      %1160 = vmatpush1.msra.mxu0 0.0
      %1161 = vmatprep.subr.mxu0 0.0
      %1162 = vmatpush1.msra.mxu0 0.0
      %1163 = vmatprep.subr.mxu0 0.0
      %1164 = vmatpush1.msra.mxu0 %v263
      %1165 = vmatprep.subr.mxu0 0.0
      %1166 = vmatpush1.msra.mxu0 %v262
      %1167 = vmatprep.subr.mxu0 0.0
      %1168 = vmatpush2.msra.mxu0 0.0
      %1169 = vmatprep.subr.mxu0 0.0
      %1170 = vmatpush2.msra.mxu0 0.0
      %1171 = vmatprep.subr.mxu0 0.0
      %1172 = vmatpush2.msra.mxu0 0.0
      %1173 = vmatprep.subr.mxu0 0.0
      %1174 = vmatpush2.msra.mxu0 0.0
      %1175 = vmatprep.subr.mxu0 0.0
      %1176 = vmatpush2.msra.mxu0 0.0
      %1177 = vmatprep.subr.mxu0 0.0
      %1178 = vmatpush2.msra.mxu0 0.0
      %1179 = vmatprep.subr.mxu0 0.0
      %1180 = vmatpush2.msra.mxu0 0.0
      %1181 = vmatprep.subr.mxu0 0.0
      %1182 = vmatpush2.msra.mxu0 0.0
      %1183 = vmatprep.subr.mxu0 0.0
      %1184 = vmatpush2.msra.mxu0 0.0
      %1185 = vmatprep.subr.mxu0 0.0
      %1186 = vmatpush2.msra.mxu0 0.0
      %1187 = vmatprep.subr.mxu0 0.0
      %1188 = vmatpush2.msra.mxu0 0.0
      %1189 = vmatprep.subr.mxu0 0.0
      %1190 = vmatpush2.msra.mxu0 0.0
      %1191 = vmatprep.subr.mxu0 0.0
      %1192 = vmatpush2.msra.mxu0 0.0
      %1193 = vmatprep.subr.mxu0 0.0
      %1194 = vmatpush2.msra.mxu0 0.0
      %1195 = vmatprep.subr.mxu0 0.0
      %1196 = vmatpush2.msra.mxu0 0.0
      %1197 = vmatprep.subr.mxu0 0.0
      %1198 = vmatpush2.msra.mxu0 0.0
      %1199 = vmatprep.mubr.f32.mxu0 0.0
      %1200 = vmatmul.mubr.f32.gmra.mxu0 %v1133
      %v1201 = vpop.f32.mrf.mxu0
      %v1202 = vadd.f32 0.0, %v1201
      %v1203 = vpop.f32.mrf.mxu0
      %1204 = vdwg.mxu0
      %1206 = vrot.lane.b32.xlu0 %v1202, 24
      %v1207 = vpop.permute.xlu0 %1206
      %vm1209 = vcmask 261312
      %1210 = vst.msk [vmem:[%s222] sm:$0xff] %vm1209, %v1207
      %1211 = vrot.lane.b32.xlu0 %v886, 111
      %v1212 = vpop.permute.xlu0 %1211
      %v1213 = vsel %vm891, %v1212, 0
      %1215 = vmatprep.subr.mxu0 0.0
      %1216 = vmatpush1.msra.mxu0 0.0
      %1217 = vmatprep.subr.mxu0 0.0
      %1218 = vmatpush1.msra.mxu0 0.0
      %1219 = vmatprep.subr.mxu0 0.0
      %1220 = vmatpush1.msra.mxu0 0.0
      %1221 = vmatprep.subr.mxu0 0.0
      %1222 = vmatpush1.msra.mxu0 0.0
      %1223 = vmatprep.subr.mxu0 0.0
      %1224 = vmatpush1.msra.mxu0 0.0
      %1225 = vmatprep.subr.mxu0 0.0
      %1226 = vmatpush1.msra.mxu0 0.0
      %1227 = vmatprep.subr.mxu0 0.0
      %1228 = vmatpush1.msra.mxu0 0.0
      %1229 = vmatprep.subr.mxu0 0.0
      %1230 = vmatpush1.msra.mxu0 0.0
      %1231 = vmatprep.subr.mxu0 0.0
      %1232 = vmatpush1.msra.mxu0 0.0
      %1233 = vmatprep.subr.mxu0 0.0
      %1234 = vmatpush1.msra.mxu0 0.0
      %1235 = vmatprep.subr.mxu0 0.0
      %1236 = vmatpush1.msra.mxu0 0.0
      %1237 = vmatprep.subr.mxu0 0.0
      %1238 = vmatpush1.msra.mxu0 0.0
      %1239 = vmatprep.subr.mxu0 0.0
      %1240 = vmatpush1.msra.mxu0 0.0
      %1241 = vmatprep.subr.mxu0 0.0
      %1242 = vmatpush1.msra.mxu0 0.0
      %1243 = vmatprep.subr.mxu0 0.0
      %1244 = vmatpush1.msra.mxu0 %v263
      %1245 = vmatprep.subr.mxu0 0.0
      %1246 = vmatpush1.msra.mxu0 %v262
      %1247 = vmatprep.subr.mxu0 0.0
      %1248 = vmatpush2.msra.mxu0 0.0
      %1249 = vmatprep.subr.mxu0 0.0
      %1250 = vmatpush2.msra.mxu0 0.0
      %1251 = vmatprep.subr.mxu0 0.0
      %1252 = vmatpush2.msra.mxu0 0.0
      %1253 = vmatprep.subr.mxu0 0.0
      %1254 = vmatpush2.msra.mxu0 0.0
      %1255 = vmatprep.subr.mxu0 0.0
      %1256 = vmatpush2.msra.mxu0 0.0
      %1257 = vmatprep.subr.mxu0 0.0
      %1258 = vmatpush2.msra.mxu0 0.0
      %1259 = vmatprep.subr.mxu0 0.0
      %1260 = vmatpush2.msra.mxu0 0.0
      %1261 = vmatprep.subr.mxu0 0.0
      %1262 = vmatpush2.msra.mxu0 0.0
      %1263 = vmatprep.subr.mxu0 0.0
      %1264 = vmatpush2.msra.mxu0 0.0
      %1265 = vmatprep.subr.mxu0 0.0
      %1266 = vmatpush2.msra.mxu0 0.0
      %1267 = vmatprep.subr.mxu0 0.0
      %1268 = vmatpush2.msra.mxu0 0.0
      %1269 = vmatprep.subr.mxu0 0.0
      %1270 = vmatpush2.msra.mxu0 0.0
      %1271 = vmatprep.subr.mxu0 0.0
      %1272 = vmatpush2.msra.mxu0 0.0
      %1273 = vmatprep.subr.mxu0 0.0
      %1274 = vmatpush2.msra.mxu0 0.0
      %1275 = vmatprep.subr.mxu0 0.0
      %1276 = vmatpush2.msra.mxu0 0.0
      %1277 = vmatprep.subr.mxu0 0.0
      %1278 = vmatpush2.msra.mxu0 0.0
      %1279 = vmatprep.mubr.f32.mxu0 0.0
      %1280 = vmatmul.mubr.f32.gmra.mxu0 %v1213
      %v1281 = vpop.f32.mrf.mxu0
      %v1282 = vadd.f32 0.0, %v1281
      %v1283 = vpop.f32.mrf.mxu0
      %1284 = vdwg.mxu0
      %1286 = vrot.lane.b32.xlu0 %v1282, 32
      %v1287 = vpop.permute.xlu0 %1286
      %vm1289 = vcmask 326912
      %1290 = vst.msk [vmem:[%s222] sm:$0xff] %vm1289, %v1287
      %1291 = vrot.lane.b32.xlu0 %v886, 79
      %v1292 = vpop.permute.xlu0 %1291
      %v1293 = vsel %vm891, %v1292, 0
      %1295 = vmatprep.subr.mxu0 0.0
      %1296 = vmatpush1.msra.mxu0 0.0
      %1297 = vmatprep.subr.mxu0 0.0
      %1298 = vmatpush1.msra.mxu0 0.0
      %1299 = vmatprep.subr.mxu0 0.0
      %1300 = vmatpush1.msra.mxu0 0.0
      %1301 = vmatprep.subr.mxu0 0.0
      %1302 = vmatpush1.msra.mxu0 0.0
      %1303 = vmatprep.subr.mxu0 0.0
      %1304 = vmatpush1.msra.mxu0 0.0
      %1305 = vmatprep.subr.mxu0 0.0
      %1306 = vmatpush1.msra.mxu0 0.0
      %1307 = vmatprep.subr.mxu0 0.0
      %1308 = vmatpush1.msra.mxu0 0.0
      %1309 = vmatprep.subr.mxu0 0.0
      %1310 = vmatpush1.msra.mxu0 0.0
      %1311 = vmatprep.subr.mxu0 0.0
      %1312 = vmatpush1.msra.mxu0 0.0
      %1313 = vmatprep.subr.mxu0 0.0
      %1314 = vmatpush1.msra.mxu0 0.0
      %1315 = vmatprep.subr.mxu0 0.0
      %1316 = vmatpush1.msra.mxu0 0.0
      %1317 = vmatprep.subr.mxu0 0.0
      %1318 = vmatpush1.msra.mxu0 0.0
      %1319 = vmatprep.subr.mxu0 0.0
      %1320 = vmatpush1.msra.mxu0 0.0
      %1321 = vmatprep.subr.mxu0 0.0
      %1322 = vmatpush1.msra.mxu0 0.0
      %1323 = vmatprep.subr.mxu0 0.0
      %1324 = vmatpush1.msra.mxu0 %v263
      %1325 = vmatprep.subr.mxu0 0.0
      %1326 = vmatpush1.msra.mxu0 %v262
      %1327 = vmatprep.subr.mxu0 0.0
      %1328 = vmatpush2.msra.mxu0 0.0
      %1329 = vmatprep.subr.mxu0 0.0
      %1330 = vmatpush2.msra.mxu0 0.0
      %1331 = vmatprep.subr.mxu0 0.0
      %1332 = vmatpush2.msra.mxu0 0.0
      %1333 = vmatprep.subr.mxu0 0.0
      %1334 = vmatpush2.msra.mxu0 0.0
      %1335 = vmatprep.subr.mxu0 0.0
      %1336 = vmatpush2.msra.mxu0 0.0
      %1337 = vmatprep.subr.mxu0 0.0
      %1338 = vmatpush2.msra.mxu0 0.0
      %1339 = vmatprep.subr.mxu0 0.0
      %1340 = vmatpush2.msra.mxu0 0.0
      %1341 = vmatprep.subr.mxu0 0.0
      %1342 = vmatpush2.msra.mxu0 0.0
      %1343 = vmatprep.subr.mxu0 0.0
      %1344 = vmatpush2.msra.mxu0 0.0
      %1345 = vmatprep.subr.mxu0 0.0
      %1346 = vmatpush2.msra.mxu0 0.0
      %1347 = vmatprep.subr.mxu0 0.0
      %1348 = vmatpush2.msra.mxu0 0.0
      %1349 = vmatprep.subr.mxu0 0.0
      %1350 = vmatpush2.msra.mxu0 0.0
      %1351 = vmatprep.subr.mxu0 0.0
      %1352 = vmatpush2.msra.mxu0 0.0
      %1353 = vmatprep.subr.mxu0 0.0
      %1354 = vmatpush2.msra.mxu0 0.0
      %1355 = vmatprep.subr.mxu0 0.0
      %1356 = vmatpush2.msra.mxu0 0.0
      %1357 = vmatprep.subr.mxu0 0.0
      %1358 = vmatpush2.msra.mxu0 0.0
      %1359 = vmatprep.mubr.f32.mxu0 0.0
      %1360 = vmatmul.mubr.f32.gmra.mxu0 %v1293
      %v1361 = vpop.f32.mrf.mxu0
      %v1362 = vadd.f32 0.0, %v1361
      %v1363 = vpop.f32.mrf.mxu0
      %1364 = vdwg.mxu0
      %1366 = vrot.lane.b32.xlu0 %v1362, 40
      %v1367 = vpop.permute.xlu0 %1366
      %vm1369 = vcmask 392512
      %1370 = vst.msk [vmem:[%s222] sm:$0xff] %vm1369, %v1367
      %1371 = vrot.lane.b32.xlu0 %v886, 47
      %v1372 = vpop.permute.xlu0 %1371
      %v1373 = vsel %vm891, %v1372, 0
      %1375 = vmatprep.subr.mxu0 0.0
      %1376 = vmatpush1.msra.mxu0 0.0
      %1377 = vmatprep.subr.mxu0 0.0
      %1378 = vmatpush1.msra.mxu0 0.0
      %1379 = vmatprep.subr.mxu0 0.0
      %1380 = vmatpush1.msra.mxu0 0.0
      %1381 = vmatprep.subr.mxu0 0.0
      %1382 = vmatpush1.msra.mxu0 0.0
      %1383 = vmatprep.subr.mxu0 0.0
      %1384 = vmatpush1.msra.mxu0 0.0
      %1385 = vmatprep.subr.mxu0 0.0
      %1386 = vmatpush1.msra.mxu0 0.0
      %1387 = vmatprep.subr.mxu0 0.0
      %1388 = vmatpush1.msra.mxu0 0.0
      %1389 = vmatprep.subr.mxu0 0.0
      %1390 = vmatpush1.msra.mxu0 0.0
      %1391 = vmatprep.subr.mxu0 0.0
      %1392 = vmatpush1.msra.mxu0 0.0
      %1393 = vmatprep.subr.mxu0 0.0
      %1394 = vmatpush1.msra.mxu0 0.0
      %1395 = vmatprep.subr.mxu0 0.0
      %1396 = vmatpush1.msra.mxu0 0.0
      %1397 = vmatprep.subr.mxu0 0.0
      %1398 = vmatpush1.msra.mxu0 0.0
      %1399 = vmatprep.subr.mxu0 0.0
      %1400 = vmatpush1.msra.mxu0 0.0
      %1401 = vmatprep.subr.mxu0 0.0
      %1402 = vmatpush1.msra.mxu0 0.0
      %1403 = vmatprep.subr.mxu0 0.0
      %1404 = vmatpush1.msra.mxu0 %v263
      %1405 = vmatprep.subr.mxu0 0.0
      %1406 = vmatpush1.msra.mxu0 %v262
      %1407 = vmatprep.subr.mxu0 0.0
      %1408 = vmatpush2.msra.mxu0 0.0
      %1409 = vmatprep.subr.mxu0 0.0
      %1410 = vmatpush2.msra.mxu0 0.0
      %1411 = vmatprep.subr.mxu0 0.0
      %1412 = vmatpush2.msra.mxu0 0.0
      %1413 = vmatprep.subr.mxu0 0.0
      %1414 = vmatpush2.msra.mxu0 0.0
      %1415 = vmatprep.subr.mxu0 0.0
      %1416 = vmatpush2.msra.mxu0 0.0
      %1417 = vmatprep.subr.mxu0 0.0
      %1418 = vmatpush2.msra.mxu0 0.0
      %1419 = vmatprep.subr.mxu0 0.0
      %1420 = vmatpush2.msra.mxu0 0.0
      %1421 = vmatprep.subr.mxu0 0.0
      %1422 = vmatpush2.msra.mxu0 0.0
      %1423 = vmatprep.subr.mxu0 0.0
      %1424 = vmatpush2.msra.mxu0 0.0
      %1425 = vmatprep.subr.mxu0 0.0
      %1426 = vmatpush2.msra.mxu0 0.0
      %1427 = vmatprep.subr.mxu0 0.0
      %1428 = vmatpush2.msra.mxu0 0.0
      %1429 = vmatprep.subr.mxu0 0.0
      %1430 = vmatpush2.msra.mxu0 0.0
      %1431 = vmatprep.subr.mxu0 0.0
      %1432 = vmatpush2.msra.mxu0 0.0
      %1433 = vmatprep.subr.mxu0 0.0
      %1434 = vmatpush2.msra.mxu0 0.0
      %1435 = vmatprep.subr.mxu0 0.0
      %1436 = vmatpush2.msra.mxu0 0.0
      %1437 = vmatprep.subr.mxu0 0.0
      %1438 = vmatpush2.msra.mxu0 0.0
      %1439 = vmatprep.mubr.f32.mxu0 0.0
      %1440 = vmatmul.mubr.f32.gmra.mxu0 %v1373
      %v1441 = vpop.f32.mrf.mxu0
      %v1442 = vadd.f32 0.0, %v1441
      %v1443 = vpop.f32.mrf.mxu0
      %1444 = vdwg.mxu0
      %1446 = vrot.lane.b32.xlu0 %v1442, 48
      %v1447 = vpop.permute.xlu0 %1446
      %vm1449 = vcmask 458112
      %1450 = vst.msk [vmem:[%s222] sm:$0xff] %vm1449, %v1447
      %1452 = vrot.lane.b32.xlu0 %v887, 15
      %v1453 = vpop.permute.xlu0 %1452
      %v1454 = vsel %vm1131, %v1130, %v1453
      %v1455 = vsel %vm891, %v1454, 0
      %1457 = vmatprep.subr.mxu0 0.0
      %1458 = vmatpush1.msra.mxu0 0.0
      %1459 = vmatprep.subr.mxu0 0.0
      %1460 = vmatpush1.msra.mxu0 0.0
      %1461 = vmatprep.subr.mxu0 0.0
      %1462 = vmatpush1.msra.mxu0 0.0
      %1463 = vmatprep.subr.mxu0 0.0
      %1464 = vmatpush1.msra.mxu0 0.0
      %1465 = vmatprep.subr.mxu0 0.0
      %1466 = vmatpush1.msra.mxu0 0.0
      %1467 = vmatprep.subr.mxu0 0.0
      %1468 = vmatpush1.msra.mxu0 0.0
      %1469 = vmatprep.subr.mxu0 0.0
      %1470 = vmatpush1.msra.mxu0 0.0
      %1471 = vmatprep.subr.mxu0 0.0
      %1472 = vmatpush1.msra.mxu0 0.0
      %1473 = vmatprep.subr.mxu0 0.0
      %1474 = vmatpush1.msra.mxu0 0.0
      %1475 = vmatprep.subr.mxu0 0.0
      %1476 = vmatpush1.msra.mxu0 0.0
      %1477 = vmatprep.subr.mxu0 0.0
      %1478 = vmatpush1.msra.mxu0 0.0
      %1479 = vmatprep.subr.mxu0 0.0
      %1480 = vmatpush1.msra.mxu0 0.0
      %1481 = vmatprep.subr.mxu0 0.0
      %1482 = vmatpush1.msra.mxu0 0.0
      %1483 = vmatprep.subr.mxu0 0.0
      %1484 = vmatpush1.msra.mxu0 0.0
      %1485 = vmatprep.subr.mxu0 0.0
      %1486 = vmatpush1.msra.mxu0 %v263
      %1487 = vmatprep.subr.mxu0 0.0
      %1488 = vmatpush1.msra.mxu0 %v262
      %1489 = vmatprep.subr.mxu0 0.0
      %1490 = vmatpush2.msra.mxu0 0.0
      %1491 = vmatprep.subr.mxu0 0.0
      %1492 = vmatpush2.msra.mxu0 0.0
      %1493 = vmatprep.subr.mxu0 0.0
      %1494 = vmatpush2.msra.mxu0 0.0
      %1495 = vmatprep.subr.mxu0 0.0
      %1496 = vmatpush2.msra.mxu0 0.0
      %1497 = vmatprep.subr.mxu0 0.0
      %1498 = vmatpush2.msra.mxu0 0.0
      %1499 = vmatprep.subr.mxu0 0.0
      %1500 = vmatpush2.msra.mxu0 0.0
      %1501 = vmatprep.subr.mxu0 0.0
      %1502 = vmatpush2.msra.mxu0 0.0
      %1503 = vmatprep.subr.mxu0 0.0
      %1504 = vmatpush2.msra.mxu0 0.0
      %1505 = vmatprep.subr.mxu0 0.0
      %1506 = vmatpush2.msra.mxu0 0.0
      %1507 = vmatprep.subr.mxu0 0.0
      %1508 = vmatpush2.msra.mxu0 0.0
      %1509 = vmatprep.subr.mxu0 0.0
      %1510 = vmatpush2.msra.mxu0 0.0
      %1511 = vmatprep.subr.mxu0 0.0
      %1512 = vmatpush2.msra.mxu0 0.0
      %1513 = vmatprep.subr.mxu0 0.0
      %1514 = vmatpush2.msra.mxu0 0.0
      %1515 = vmatprep.subr.mxu0 0.0
      %1516 = vmatpush2.msra.mxu0 0.0
      %1517 = vmatprep.subr.mxu0 0.0
      %1518 = vmatpush2.msra.mxu0 0.0
      %1519 = vmatprep.subr.mxu0 0.0
      %1520 = vmatpush2.msra.mxu0 0.0
      %1521 = vmatprep.mubr.f32.mxu0 0.0
      %1522 = vmatmul.mubr.f32.gmra.mxu0 %v1455
      %v1523 = vpop.f32.mrf.mxu0
      %v1524 = vadd.f32 0.0, %v1523
      %v1525 = vpop.f32.mrf.mxu0
      %1526 = vdwg.mxu0
      %1528 = vrot.lane.b32.xlu0 %v1524, 56
      %v1529 = vpop.permute.xlu0 %1528
      %vm1531 = vcmask 523712
      %1532 = vst.msk [vmem:[%s222] sm:$0xff] %vm1531, %v1529
      %p1533 = scmp.lt.s32.totalorder %s16, 1
      %s1534 = scalar_select %p1533, %s16, 1
      %s1535 = smul.addr %s1534, 8
      %s1536 = scalar_lea.vmem %s5, %s1535
      // Predicated region
      $region41: #{conv_block_base.1} parent=39 // pred_check
        %p1537 = pneg %p144
      $region42: #{conv_block_base.1} parent=39 // pred_check_branch
        %1539 = sbr.rel (%p1537) target = $region44
      $region43: #{conv_block_base.1} parent=39 // pred_region
        _
      $region44: #{conv_block_base.1} parent=39 // pred_fallthru
        _
    $region40: #{conv_block_base.1} parent=5 // pred_fallthru
      _
    %p1540 = scmp.le.s32.totalorder 2, %s11
    // Predicated region
    $region45: #{conv_block_base.1} parent=5 // pred_check
      %p1541 = pneg %p1540
    $region46: #{conv_block_base.1} parent=5 // pred_check_branch
      %1543 = sbr.rel (%p1541) target = $region48
    $region47: #{conv_block_base.1} parent=5 // pred_region
      %s1544 = ssub.s32 %s11, 2
      // Predicated region
      $region49: #{conv_block_base.1} parent=47 // pred_check
        %p1545 = pneg %p150
      $region50: #{conv_block_base.1} parent=47 // pred_check_branch
        %1547 = sbr.rel (%p1545) target = $region52
      $region51: #{conv_block_base.1} parent=47 // pred_region
        %p1548 = scmp.lt.s32.totalorder %s17, 1
        %s1549 = scalar_select %p1548, %s17, 1
        %s1550 = smul.addr %s1549, 8
        %s1551 = scalar_lea.vmem %s5, %s1550
      $region52: #{conv_block_base.1} parent=47 // pred_fallthru
        _
    $region48: #{conv_block_base.1} parent=5 // pred_fallthru
      _
  $region6: #{conv_block_base.1} parent=0 // loop_footer
    %s15 = sadd.s32 1, %s11
  $region7: #{conv_block_base.1} parent=0 // loop_footer_branch
    %10 = sbr.rel target = $region3
  $region8: #{conv_block_base.1} parent=0 // loop_exit
    _

</llo_original>
